<compile_context>
chip_gen: v6e
topology: v6e:2x2x1
jax: 0.10.0
libtpu: 0.0.40
codegen_flags: <defaults>
</compile_context>

<pallas_src>
import math

import jax
import jax.numpy as jnp
from jax import lax
from jax.experimental import pallas as pl
from jax.experimental.pallas import tpu as pltpu


# ---------------------------------------------------------------------------
# kernels
# ---------------------------------------------------------------------------

def _ds_conv_kernel(xb_ref, xh_ref, w_ref, b_ref, o_ref):
    """Stride-2 3x3 conv on one (batch, row-tile) block.

    xb_ref: (1, 4, th, Wp1, C)  parity planes p = 2*ph + pw (ph/pw = row/col parity)
    xh_ref: (1, 2, 1,  Wp1, C)  halo: even-row-parity planes at global row (j+1)*th
    w_ref : (3, 3*C, C)         per-kh fused weights, K ordered (kw, cin)
    b_ref : (1, C)              f32 bias
    o_ref : (1, th, Wo, C)
    """
    th, Wo, C = o_ref.shape[1], o_ref.shape[2], o_ref.shape[3]

    # parity planes of the body block, each (th, Wp1, C)
    p00 = xb_ref[0, 0]
    p01 = xb_ref[0, 1]
    p10 = xb_ref[0, 2]
    p11 = xb_ref[0, 3]
    # column shift hoisted out of the tap loop (kw=2 taps read col c+1 of pw=0 planes)
    p00s = p00[:, 1:, :]                           # (th, Wo, C)
    p10s = p10[:, 1:, :]

    w0, w1, w2 = w_ref[0], w_ref[1], w_ref[2]      # (3C, C) each
    bias = b_ref[...]                              # (1, C), broadcasts over rows

    def lhs(t0, t1, t2, rows):
        # lane-axis concat of the 3 kw taps -> a single K=3C MXU operand
        return jnp.concatenate([t0, t1, t2], axis=-1).reshape(rows * Wo, 3 * C)

    # kh = 0 (even rows, row offset 0) and kh = 1 (odd rows, row offset 0)
    acc = jnp.dot(lhs(p00[:, :Wo], p01[:, :Wo], p00s, th), w0,
                  preferred_element_type=jnp.float32) + bias
    acc = acc + jnp.dot(lhs(p10[:, :Wo], p11[:, :Wo], p10s, th), w1,
                        preferred_element_type=jnp.float32)
    acc = acc.reshape(th, Wo, C)

    # kh = 2 (even rows, row offset +1): body rows 1..th-1 feed output rows 0..th-2, the
    # one-row halo feeds the last output row.  No even+halo concat is ever materialized.
    h00 = xh_ref[0, 0]                             # (1, Wp1, C)
    h01 = xh_ref[0, 1]
    halo = jnp.dot(lhs(h00[:, :Wo], h01[:, :Wo], h00[:, 1:, :], 1), w2,
                   preferred_element_type=jnp.float32).reshape(1, Wo, C)

    if th > 1:
        body = jnp.dot(lhs(p00[1:, :Wo], p01[1:, :Wo], p00s[1:], th - 1), w2,
                       preferred_element_type=jnp.float32).reshape(th - 1, Wo, C)
        o_ref[0, : th - 1] = (acc[: th - 1] + body).astype(o_ref.dtype)
        o_ref[0, th - 1:] = (acc[th - 1:] + halo).astype(o_ref.dtype)
    else:
        o_ref[0] = (acc + halo).astype(o_ref.dtype)


def _ds_pool_kernel(x_ref, o_ref):
    """2x2 stride-2 average pool on one (batch, row-tile) block.

    x_ref: (1, th, 2, Wo, 2*C)  row parity on axis 2, column parity folded into lanes
    o_ref: (1, th, Wo, C)
    """
    C = o_ref.shape[3]
    x = x_ref[0].astype(jnp.float32)               # (th, 2, Wo, 2C)
    s = x[:, 0] + x[:, 1]                          # (th, Wo, 2C)
    o_ref[0] = ((s[..., :C] + s[..., C:]) * jnp.float32(0.25)).astype(o_ref.dtype)


# ---------------------------------------------------------------------------
# wrapper
# ---------------------------------------------------------------------------

def _vmem_limit_bytes():
    """Generation-aware VMEM limit (v7x: 64 MiB / TensorCore vs 128 MiB on v5e/v6e)."""
    cap = 64 * 1024 * 1024
    try:
        cap = int(getattr(pltpu.get_tpu_info(), "vmem_capacity_bytes", cap))
    except Exception:
        pass
    return min(cap * 3 // 4, 96 * 1024 * 1024)


def _pick_row_tile(Ho, B, per_row_bytes, fixed_bytes, budget_bytes):
    """Largest row tile whose resident working set fits the budget; with B == 1 the tile
    is capped so there are >= 2 grid blocks (keeps both v7x TensorCores busy)."""
    avail = max(budget_bytes - fixed_bytes, per_row_bytes)
    th = max(1, min(Ho, int(avail // per_row_bytes)))
    if B == 1 and Ho >= 2:
        th = min(th, -(-Ho // 2))                  # ceil(Ho / 2)
    return th


def downsample(x, params, with_conv=True, compute_dtype=jnp.bfloat16):
    """Forward of Downsample.  x: (B, C, H, W) NCHW, returns (B, C, H//2, W//2) NCHW.

    compute_dtype sets the conv's MXU operand dtype (bf16 default for speed; pass
    jnp.float32 for bit-closer-to-PyTorch results).  Pooling always runs in f32.
    """
    B, C, H, W = x.shape
    Ho, Wo = H // 2, W // 2                        # PyTorch output size for both branches
    limit = _vmem_limit_bytes()
    budget = limit // 2                            # per-step working set, pipeline headroom

    cparams = pltpu.CompilerParams(
        dimension_semantics=("parallel", "parallel"),
        vmem_limit_bytes=limit)

    if with_conv:
        Wp1 = Wo + 1
        cdb = jnp.dtype(compute_dtype).itemsize
        odb = jnp.dtype(x.dtype).itemsize
        per_row = (2 * 4 * Wp1 * C * cdb            # body block, double buffered
                   + 2 * Wo * C * odb                # output block, double buffered
                   + Wo * C * (6 * cdb + 12)         # lhs concats + f32 partials
                   + Wo * C * 8)                     # slack for relayout copies
        fixed = (2 * 2 * Wp1 * C * cdb               # halo block x2
                 + 2 * 9 * C * C * cdb               # fused weights x2
                 + 4 * C)
        th = _pick_row_tile(Ho, B, per_row, fixed, budget)
        n_t = -(-Ho // th)
        Ho_pad = n_t * th
        Hp1 = Ho_pad + 1

        # One fused relayout: NCHW -> zero-padded parity planes (B, 4, Hp1, Wp1, C),
        # cast to the MXU operand dtype in the same pass.
        xp = jnp.pad(x, ((0, 0), (0, 0), (0, 2 * Hp1 - H), (0, 2 * Wp1 - W)))
        xs = (xp.reshape(B, C, Hp1, 2, Wp1, 2)
                .transpose(0, 3, 5, 2, 4, 1)         # (B, ph, pw, r, c, C)
                .reshape(B, 4, Hp1, Wp1, C)
                .astype(compute_dtype))

        # (Cout, Cin, 3, 3) -> per-kh fused (3, 3*Cin, Cout), K ordered (kw, cin)
        w = (jnp.transpose(params["w"], (2, 3, 1, 0))
                .reshape(3, 3 * C, C).astype(compute_dtype))
        b = params["b"].reshape(1, C).astype(jnp.float32)

        cost = pl.CostEstimate(
            flops=2 * B * Ho_pad * Wo * C * C * 9,
            transcendentals=0,
            bytes_accessed=(B * 4 * Hp1 * Wp1 * C + 9 * C * C) * cdb
                           + B * Ho_pad * Wo * C * odb)

        out = pl.pallas_call(
            _ds_conv_kernel,
            out_shape=jax.ShapeDtypeStruct((B, Ho_pad, Wo, C), x.dtype),
            grid=(B, n_t),
            in_specs=[
                # body: all 4 parity planes, th output rows
                pl.BlockSpec((1, 4, th, Wp1, C), lambda bb, j: (bb, 0, j, 0, 0)),
                # halo: one extra even-row-parity row (needed by the kh=2 taps)
                pl.BlockSpec((1, 2, 1, Wp1, C), lambda bb, j: (bb, 0, (j + 1) * th, 0, 0)),
                # grid-invariant fused weights / bias
                pl.BlockSpec((3, 3 * C, C), lambda bb, j: (0, 0, 0)),
                pl.BlockSpec((1, C), lambda bb, j: (0, 0)),
            ],
            out_specs=pl.BlockSpec((1, th, Wo, C), lambda bb, j: (bb, j, 0, 0)),
            compiler_params=cparams,
            cost_estimate=cost,
        )(xs, xs, w, b)
        out = out[:, :Ho]                            # drop row-tile padding (fuses w/ transpose)
    else:
        ib = jnp.dtype(x.dtype).itemsize
        per_row = (2 * 2 * Wo * 2 * C * ib           # input block x2
                   + 2 * Wo * C * ib                 # output block x2
                   + 8 * Wo * C * 4)                 # f32 temporaries (generous)
        th = _pick_row_tile(Ho, B, per_row, 0, budget)
        n_t = -(-Ho // th)
        Ho_pad = n_t * th

        # Single relayout NCHW -> (B, Ho, 2, Wo, 2C): the 2x2 window rides the leading
        # "2" axis (row parity) and the lane axis (column parity folded into channels).
        xr = (x[:, :, : 2 * Ho, : 2 * Wo]
                .reshape(B, C, Ho, 2, Wo, 2)
                .transpose(0, 2, 3, 4, 5, 1)         # (B, r, ph, ow, pw, C)
                .reshape(B, Ho, 2, Wo, 2 * C))
        if Ho_pad != Ho:
            xr = jnp.pad(xr, ((0, 0), (0, Ho_pad - Ho), (0, 0), (0, 0), (0, 0)))

        out = pl.pallas_call(
            _ds_pool_kernel,
            out_shape=jax.ShapeDtypeStruct((B, Ho_pad, Wo, C), x.dtype),
            grid=(B, n_t),
            in_specs=[pl.BlockSpec((1, th, 2, Wo, 2 * C),
                                   lambda bb, j: (bb, j, 0, 0, 0))],
            out_specs=pl.BlockSpec((1, th, Wo, C), lambda bb, j: (bb, j, 0, 0)),
            compiler_params=cparams,
        )(xr)
        out = out[:, :Ho]

    # back to NCHW to match the PyTorch module's contract
    return jnp.transpose(out, (0, 3, 1, 2))


# ---------------------------------------------------------------------------
# params / reference / test
# ---------------------------------------------------------------------------

def init_params(key, C):
    """Mirror PyTorch Conv2d default init (uniform(-1/sqrt(fan_in), 1/sqrt(fan_in)))."""
    k1, k2 = jax.random.split(key)
    bound = 1.0 / math.sqrt(C * 9)
    w = jax.random.uniform(k1, (C, C, 3, 3), jnp.float32, -bound, bound)
    b = jax.random.uniform(k2, (C,), jnp.float32, -bound, bound)
    return {"w": w, "b": b}


def reference(x, params, with_conv):
    """Pure-JAX replica of the PyTorch forward for verification."""
    if with_conv:
        xp = jnp.pad(x, ((0, 0), (0, 0), (0, 1), (0, 1)))        # pad (0,1,0,1): right/bottom
        out = lax.conv_general_dilated(
            xp, params["w"], window_strides=(2, 2), padding="VALID",
            dimension_numbers=("NCHW", "OIHW", "NCHW"))
        return out + params["b"].reshape(1, -1, 1, 1)
    s = lax.reduce_window(x, 0.0, lax.add, (1, 1, 2, 2), (1, 1, 2, 2), "VALID")
    return s * 0.25


if __name__ == "__main__":
    key = jax.random.PRNGKey(0)
    kx, kp, kx2 = jax.random.split(key, 3)

    B, C, H, W = 2, 4, 16, 16
    x = jax.random.normal(kx, (B, C, H, W), jnp.float32)
    params = init_params(kp, C)

    run_conv = jax.jit(lambda xx, pp: downsample(xx, pp, with_conv=True))
    run_pool = jax.jit(lambda xx, pp: downsample(xx, pp, with_conv=False))

    # with_conv=True (bf16 MXU operands -> slightly looser tolerance, documented above)
    out_c = jax.block_until_ready(run_conv(x, params))
    ref_c = reference(x, params, with_conv=True)
    assert out_c.shape == ref_c.shape == (B, C, H // 2, W // 2)
    assert jnp.allclose(out_c, ref_c, rtol=2e-2, atol=2e-2), \
        float(jnp.max(jnp.abs(out_c - ref_c)))

    # with_conv=False (exact f32 pooling)
    out_p = jax.block_until_ready(run_pool(x, params))
    ref_p = reference(x, params, with_conv=False)
    assert out_p.shape == ref_p.shape == (B, C, H // 2, W // 2)
    assert jnp.allclose(out_p, ref_p, rtol=1e-5, atol=1e-5), \
        float(jnp.max(jnp.abs(out_p - ref_p)))

    # odd spatial dims + B=1: exercises row-tile padding, the halo/body kh=2 split on a
    # multi-tile grid, and the >=2-blocks-per-batch rule for v7x.
    x_odd = jax.random.normal(kx2, (1, C, 15, 15), jnp.float32)
    out_co = jax.block_until_ready(run_conv(x_odd, params))
    ref_co = reference(x_odd, params, with_conv=True)
    assert out_co.shape == ref_co.shape == (1, C, 7, 7)
    assert jnp.allclose(out_co, ref_co, rtol=2e-2, atol=2e-2), \
        float(jnp.max(jnp.abs(out_co - ref_co)))

    out_po = jax.block_until_ready(run_pool(x_odd, params))
    ref_po = reference(x_odd, params, with_conv=False)
    assert out_po.shape == ref_po.shape == (1, C, 7, 7)
    assert jnp.allclose(out_po, ref_po, rtol=1e-5, atol=1e-5), \
        float(jnp.max(jnp.abs(out_po - ref_po)))

    print("KERNEL_OK")
</pallas_src>

<mosaic_0001>
module attributes {stable_mosaic.version = 11 : i64} {
  func.func @_ds_conv_kernel(%arg0: i32, %arg1: i32, %arg2: memref<1x4x8x9x4xbf16, #tpu.memory_space<vmem>>, %arg3: memref<1x2x1x9x4xbf16, #tpu.memory_space<vmem>>, %arg4: memref<3x12x4xbf16, #tpu.memory_space<vmem>>, %arg5: memref<1x4xf32, #tpu.memory_space<vmem>>, %arg6: memref<1x8x8x4xf32, #tpu.memory_space<vmem>>) attributes {dimension_semantics = [#tpu.dimension_semantics<parallel>, #tpu.dimension_semantics<parallel>], iteration_bounds = array<i64: 2, 1>, scalar_prefetch = 0 : i64, scratch_operands = 0 : i64, tpu.core_type = #tpu.core_type<tc>, window_params = [{transform_indices = @transform_0, window_bounds = array<i64: 1, 4, 8, 9, 4>}, {transform_indices = @transform_1, window_bounds = array<i64: 1, 2, 1, 9, 4>}, {pipeline_mode = #tpu.pipeline_mode<synchronous>, transform_indices = @transform_2, window_bounds = array<i64: 3, 12, 4>}, {pipeline_mode = #tpu.pipeline_mode<synchronous>, transform_indices = @transform_3, window_bounds = array<i64: 1, 4>}, {transform_indices = @transform_4, window_bounds = array<i64: 1, 8, 8, 4>}]} {
    %c0 = arith.constant 0 : index
    %c0_0 = arith.constant 0 : index
    %c0_1 = arith.constant 0 : index
    %c0_2 = arith.constant 0 : index
    %c0_3 = arith.constant 0 : index
    %0 = vector.load %arg2[%c0, %c0_0, %c0_1, %c0_2, %c0_3] : memref<1x4x8x9x4xbf16, #tpu.memory_space<vmem>>, vector<1x1x8x9x4xbf16>
    %1 = vector.shape_cast %0 : vector<1x1x8x9x4xbf16> to vector<8x9x4xbf16>
    %c0_4 = arith.constant 0 : index
    %c1 = arith.constant 1 : index
    %c0_5 = arith.constant 0 : index
    %c0_6 = arith.constant 0 : index
    %c0_7 = arith.constant 0 : index
    %2 = vector.load %arg2[%c0_4, %c1, %c0_5, %c0_6, %c0_7] : memref<1x4x8x9x4xbf16, #tpu.memory_space<vmem>>, vector<1x1x8x9x4xbf16>
    %3 = vector.shape_cast %2 : vector<1x1x8x9x4xbf16> to vector<8x9x4xbf16>
    %c0_8 = arith.constant 0 : index
    %c2 = arith.constant 2 : index
    %c0_9 = arith.constant 0 : index
    %c0_10 = arith.constant 0 : index
    %c0_11 = arith.constant 0 : index
    %4 = vector.load %arg2[%c0_8, %c2, %c0_9, %c0_10, %c0_11] : memref<1x4x8x9x4xbf16, #tpu.memory_space<vmem>>, vector<1x1x8x9x4xbf16>
    %5 = vector.shape_cast %4 : vector<1x1x8x9x4xbf16> to vector<8x9x4xbf16>
    %c0_12 = arith.constant 0 : index
    %c3 = arith.constant 3 : index
    %c0_13 = arith.constant 0 : index
    %c0_14 = arith.constant 0 : index
    %c0_15 = arith.constant 0 : index
    %6 = vector.load %arg2[%c0_12, %c3, %c0_13, %c0_14, %c0_15] : memref<1x4x8x9x4xbf16, #tpu.memory_space<vmem>>, vector<1x1x8x9x4xbf16>
    %7 = vector.shape_cast %6 : vector<1x1x8x9x4xbf16> to vector<8x9x4xbf16>
    %8 = vector.extract_strided_slice %1 {offsets = [0, 1, 0], sizes = [8, 8, 4], strides = [1, 1, 1]} : vector<8x9x4xbf16> to vector<8x8x4xbf16>
    %9 = vector.extract_strided_slice %5 {offsets = [0, 1, 0], sizes = [8, 8, 4], strides = [1, 1, 1]} : vector<8x9x4xbf16> to vector<8x8x4xbf16>
    %c0_16 = arith.constant 0 : index
    %c0_17 = arith.constant 0 : index
    %c0_18 = arith.constant 0 : index
    %10 = vector.load %arg4[%c0_16, %c0_17, %c0_18] : memref<3x12x4xbf16, #tpu.memory_space<vmem>>, vector<1x12x4xbf16>
    %11 = vector.shape_cast %10 : vector<1x12x4xbf16> to vector<12x4xbf16>
    %c1_19 = arith.constant 1 : index
    %c0_20 = arith.constant 0 : index
    %c0_21 = arith.constant 0 : index
    %12 = vector.load %arg4[%c1_19, %c0_20, %c0_21] : memref<3x12x4xbf16, #tpu.memory_space<vmem>>, vector<1x12x4xbf16>
    %13 = vector.shape_cast %12 : vector<1x12x4xbf16> to vector<12x4xbf16>
    %c2_22 = arith.constant 2 : index
    %c0_23 = arith.constant 0 : index
    %c0_24 = arith.constant 0 : index
    %14 = vector.load %arg4[%c2_22, %c0_23, %c0_24] : memref<3x12x4xbf16, #tpu.memory_space<vmem>>, vector<1x12x4xbf16>
    %15 = vector.shape_cast %14 : vector<1x12x4xbf16> to vector<12x4xbf16>
    %c0_25 = arith.constant 0 : index
    %c0_26 = arith.constant 0 : index
    %16 = vector.load %arg5[%c0_25, %c0_26] : memref<1x4xf32, #tpu.memory_space<vmem>>, vector<1x4xf32>
    %17 = vector.extract_strided_slice %1 {offsets = [0, 0, 0], sizes = [8, 8, 4], strides = [1, 1, 1]} : vector<8x9x4xbf16> to vector<8x8x4xbf16>
    %18 = vector.extract_strided_slice %3 {offsets = [0, 0, 0], sizes = [8, 8, 4], strides = [1, 1, 1]} : vector<8x9x4xbf16> to vector<8x8x4xbf16>
    %19 = tpu.concatenate %17, %18, %8 in 2 : vector<8x8x4xbf16>, vector<8x8x4xbf16>, vector<8x8x4xbf16> -> vector<8x8x12xbf16>
    %20 = vector.shape_cast %19 : vector<8x8x12xbf16> to vector<64x12xbf16>
    %cst = arith.constant dense<0.000000e+00> : vector<64x4xf32>
    %21 = tpu.matmul %20, %11, %cst {dimension_numbers = #tpu.dot_dimension_numbers<[1], [0], [0], [1], [0, 0, 1, 1], [], []>} : vector<64x12xbf16>, vector<12x4xbf16>, vector<64x4xf32> -> vector<64x4xf32>
    %22 = vector.broadcast %16 : vector<1x4xf32> to vector<64x4xf32>
    %23 = arith.addf %21, %22 : vector<64x4xf32>
    %24 = vector.extract_strided_slice %5 {offsets = [0, 0, 0], sizes = [8, 8, 4], strides = [1, 1, 1]} : vector<8x9x4xbf16> to vector<8x8x4xbf16>
    %25 = vector.extract_strided_slice %7 {offsets = [0, 0, 0], sizes = [8, 8, 4], strides = [1, 1, 1]} : vector<8x9x4xbf16> to vector<8x8x4xbf16>
    %26 = tpu.concatenate %24, %25, %9 in 2 : vector<8x8x4xbf16>, vector<8x8x4xbf16>, vector<8x8x4xbf16> -> vector<8x8x12xbf16>
    %27 = vector.shape_cast %26 : vector<8x8x12xbf16> to vector<64x12xbf16>
    %cst_27 = arith.constant dense<0.000000e+00> : vector<64x4xf32>
    %28 = tpu.matmul %27, %13, %cst_27 {dimension_numbers = #tpu.dot_dimension_numbers<[1], [0], [0], [1], [0, 0, 1, 1], [], []>} : vector<64x12xbf16>, vector<12x4xbf16>, vector<64x4xf32> -> vector<64x4xf32>
    %29 = arith.addf %23, %28 : vector<64x4xf32>
    %30 = vector.shape_cast %29 : vector<64x4xf32> to vector<8x8x4xf32>
    %c0_28 = arith.constant 0 : index
    %c0_29 = arith.constant 0 : index
    %c0_30 = arith.constant 0 : index
    %c0_31 = arith.constant 0 : index
    %c0_32 = arith.constant 0 : index
    %31 = vector.load %arg3[%c0_28, %c0_29, %c0_30, %c0_31, %c0_32] : memref<1x2x1x9x4xbf16, #tpu.memory_space<vmem>>, vector<1x1x1x9x4xbf16>
    %32 = vector.shape_cast %31 : vector<1x1x1x9x4xbf16> to vector<1x9x4xbf16>
    %c0_33 = arith.constant 0 : index
    %c1_34 = arith.constant 1 : index
    %c0_35 = arith.constant 0 : index
    %c0_36 = arith.constant 0 : index
    %c0_37 = arith.constant 0 : index
    %33 = vector.load %arg3[%c0_33, %c1_34, %c0_35, %c0_36, %c0_37] : memref<1x2x1x9x4xbf16, #tpu.memory_space<vmem>>, vector<1x1x1x9x4xbf16>
    %34 = vector.shape_cast %33 : vector<1x1x1x9x4xbf16> to vector<1x9x4xbf16>
    %35 = vector.extract_strided_slice %32 {offsets = [0, 0, 0], sizes = [1, 8, 4], strides = [1, 1, 1]} : vector<1x9x4xbf16> to vector<1x8x4xbf16>
    %36 = vector.extract_strided_slice %34 {offsets = [0, 0, 0], sizes = [1, 8, 4], strides = [1, 1, 1]} : vector<1x9x4xbf16> to vector<1x8x4xbf16>
    %37 = vector.extract_strided_slice %32 {offsets = [0, 1, 0], sizes = [1, 8, 4], strides = [1, 1, 1]} : vector<1x9x4xbf16> to vector<1x8x4xbf16>
    %38 = tpu.concatenate %35, %36, %37 in 2 : vector<1x8x4xbf16>, vector<1x8x4xbf16>, vector<1x8x4xbf16> -> vector<1x8x12xbf16>
    %39 = vector.shape_cast %38 : vector<1x8x12xbf16> to vector<8x12xbf16>
    %cst_38 = arith.constant dense<0.000000e+00> : vector<8x4xf32>
    %40 = tpu.matmul %39, %15, %cst_38 {dimension_numbers = #tpu.dot_dimension_numbers<[1], [0], [0], [1], [0, 0, 1, 1], [], []>} : vector<8x12xbf16>, vector<12x4xbf16>, vector<8x4xf32> -> vector<8x4xf32>
    %41 = vector.shape_cast %40 : vector<8x4xf32> to vector<1x8x4xf32>
    %42 = vector.extract_strided_slice %1 {offsets = [1, 0, 0], sizes = [7, 8, 4], strides = [1, 1, 1]} : vector<8x9x4xbf16> to vector<7x8x4xbf16>
    %43 = vector.extract_strided_slice %3 {offsets = [1, 0, 0], sizes = [7, 8, 4], strides = [1, 1, 1]} : vector<8x9x4xbf16> to vector<7x8x4xbf16>
    %44 = vector.extract_strided_slice %8 {offsets = [1, 0, 0], sizes = [7, 8, 4], strides = [1, 1, 1]} : vector<8x8x4xbf16> to vector<7x8x4xbf16>
    %45 = tpu.concatenate %42, %43, %44 in 2 : vector<7x8x4xbf16>, vector<7x8x4xbf16>, vector<7x8x4xbf16> -> vector<7x8x12xbf16>
    %46 = vector.shape_cast %45 : vector<7x8x12xbf16> to vector<56x12xbf16>
    %cst_39 = arith.constant dense<0.000000e+00> : vector<56x4xf32>
    %47 = tpu.matmul %46, %15, %cst_39 {dimension_numbers = #tpu.dot_dimension_numbers<[1], [0], [0], [1], [0, 0, 1, 1], [], []>} : vector<56x12xbf16>, vector<12x4xbf16>, vector<56x4xf32> -> vector<56x4xf32>
    %48 = vector.shape_cast %47 : vector<56x4xf32> to vector<7x8x4xf32>
    %49 = vector.extract_strided_slice %30 {offsets = [0, 0, 0], sizes = [7, 8, 4], strides = [1, 1, 1]} : vector<8x8x4xf32> to vector<7x8x4xf32>
    %50 = arith.addf %49, %48 : vector<7x8x4xf32>
    %c0_40 = arith.constant 0 : index
    %c0_41 = arith.constant 0 : index
    %c0_42 = arith.constant 0 : index
    %c0_43 = arith.constant 0 : index
    %51 = vector.load %arg6[%c0_40, %c0_41, %c0_42, %c0_43] : memref<1x8x8x4xf32, #tpu.memory_space<vmem>>, vector<1x7x8x4xf32>
    %52 = vector.shape_cast %51 : vector<1x7x8x4xf32> to vector<7x8x4xf32>
    %53 = vector.shape_cast %50 : vector<7x8x4xf32> to vector<1x7x8x4xf32>
    tpu.vector_store %arg6[%c0_40, %c0_41, %c0_42, %c0_43], %53 {strides = array<i32>} : memref<1x8x8x4xf32, #tpu.memory_space<vmem>>, vector<1x7x8x4xf32>,
    %54 = vector.extract_strided_slice %30 {offsets = [7, 0, 0], sizes = [1, 8, 4], strides = [1, 1, 1]} : vector<8x8x4xf32> to vector<1x8x4xf32>
    %55 = arith.addf %54, %41 : vector<1x8x4xf32>
    %c0_44 = arith.constant 0 : index
    %c7 = arith.constant 7 : index
    %c0_45 = arith.constant 0 : index
    %c0_46 = arith.constant 0 : index
    %56 = vector.load %arg6[%c0_44, %c7, %c0_45, %c0_46] : memref<1x8x8x4xf32, #tpu.memory_space<vmem>>, vector<1x1x8x4xf32>
    %57 = vector.shape_cast %56 : vector<1x1x8x4xf32> to vector<1x8x4xf32>
    %58 = vector.shape_cast %55 : vector<1x8x4xf32> to vector<1x1x8x4xf32>
    tpu.vector_store %arg6[%c0_44, %c7, %c0_45, %c0_46], %58 {strides = array<i32>} : memref<1x8x8x4xf32, #tpu.memory_space<vmem>>, vector<1x1x8x4xf32>,
    return
  }
  func.func @transform_0(%arg0: i32, %arg1: i32) -> (i32, i32, i32, i32, i32) {
    %c0_i32 = arith.constant 0 : i32
    %c0_i32_0 = arith.constant 0 : i32
    %c0_i32_1 = arith.constant 0 : i32
    %c0_i32_2 = arith.constant 0 : i32
    return %arg0, %c0_i32, %arg1, %c0_i32_0, %c0_i32_1 : i32, i32, i32, i32, i32
  }
  func.func @transform_1(%arg0: i32, %arg1: i32) -> (i32, i32, i32, i32, i32) {
    %c1_i32 = arith.constant 1 : i32
    %0 = arith.addi %arg1, %c1_i32 : i32
    %c8_i32 = arith.constant 8 : i32
    %1 = arith.muli %0, %c8_i32 : i32
    %c0_i32 = arith.constant 0 : i32
    %c0_i32_0 = arith.constant 0 : i32
    %c0_i32_1 = arith.constant 0 : i32
    %c0_i32_2 = arith.constant 0 : i32
    return %arg0, %c0_i32, %1, %c0_i32_0, %c0_i32_1 : i32, i32, i32, i32, i32
  }
  func.func @transform_2(%arg0: i32, %arg1: i32) -> (i32, i32, i32) {
    %c0_i32 = arith.constant 0 : i32
    %c0_i32_0 = arith.constant 0 : i32
    %c0_i32_1 = arith.constant 0 : i32
    %c0_i32_2 = arith.constant 0 : i32
    return %c0_i32, %c0_i32_0, %c0_i32_1 : i32, i32, i32
  }
  func.func @transform_3(%arg0: i32, %arg1: i32) -> (i32, i32) {
    %c0_i32 = arith.constant 0 : i32
    %c0_i32_0 = arith.constant 0 : i32
    %c0_i32_1 = arith.constant 0 : i32
    return %c0_i32, %c0_i32_0 : i32, i32
  }
  func.func @transform_4(%arg0: i32, %arg1: i32) -> (i32, i32, i32, i32) {
    %c0_i32 = arith.constant 0 : i32
    %c0_i32_0 = arith.constant 0 : i32
    %c0_i32_1 = arith.constant 0 : i32
    return %arg0, %arg1, %c0_i32, %c0_i32_0 : i32, i32, i32, i32
  }
}

</mosaic_0001>

<llo_original>
// kernel: _lambda_.1
$region0: #{_lambda_.1}
  #allocation0 [shape = 'u32[]', space=smem, size = 0x4, offset = 0x4, fixed_abs, tag = 'smem constant byte address 0x4 - core index']
  #allocation1 [shape = 'u32[144,128]{1,0:T(1,128)}', space=vmem, size = 0x12000, scoped, tag = 'internal scratch']
  %s0 = inlined_call_operand.vmem [shape: bf16[2,4,9,9,4], index: 0, kind: input, shape index: {}, may-alias: {0,1}]
  %s1 = inlined_call_operand.vmem [shape: bf16[2,4,9,9,4], index: 1, kind: input, shape index: {}, may-alias: {0,1}]
  %s2 = inlined_call_operand.vmem [shape: bf16[3,12,4], index: 2, kind: input, shape index: {}]
  %s3 = inlined_call_operand.vmem [shape: f32[1,4], index: 3, kind: input, shape index: {}]
  %s4 = inlined_call_operand.vmem [shape: f32[2,8,8,4], index: 4, kind: output, shape index: {}]
  %s5 = sld [smem:[#allocation0]]
  $region152: #{_lambda_.1} parent=0
    _
  %s7 = ssub.s32 1, %s5
  %s8 = scalar_select 0, %s7, %s5
  $region1: #{_lambda_.1} parent=0
    #allocation2 [shape = 'u8[262144]{0}', space=vmem, size = 0x40000, scoped, tag = 'input window, operand 0']
    #allocation3 [shape = 'u8[16384]{0}', space=vmem, size = 0x4000, scoped, tag = 'input window, operand 1']
    loop: start=0, step=1, limit=4
    $region2: #{_lambda_.1} parent=1 // loop_pre_header
      _
    $region3: #{_lambda_.1} parent=1 // loop_header
      %s10 = sphi 0, %s14
      %p11 = scmp.ge.s32.totalorder %s10, 4
      %s17 = sphi 0, %s29
      %s18 = sphi 0, %s25
      %s19 = sphi 0, %s17
      %s20 = sphi 0, %s18
      %s21 = sphi 0, %s19
      %s22 = sphi 0, %s20
      %s34 = sphi 0, %s36
      %s37 = sphi 0, %s34
      %s38 = sphi 0, %s37
      %s54 = sphi 0, %s38
      %s66 = sphi 0, %s68
      %s69 = sphi 0, %s66
      %s70 = sphi 0, %s69
      %s86 = sphi 0, %s70
      %s90 = sphi 0, %s90
      %s92 = sphi 0, %s90
      %s93 = sphi 0, %s92
      %s107 = sphi 0, %s93
      %s111 = sphi 0, %s111
      %s113 = sphi 0, %s111
      %s114 = sphi 0, %s113
      %s128 = sphi 0, %s114
      %s136 = sphi 0, %s138
      %s139 = sphi 0, %s136
      %s140 = sphi 0, %s139
      %s156 = sphi 0, %s140
    $region4: #{_lambda_.1} parent=1 // loop_header_branch
      %13 = sbr.rel (%p11) target = $region8
    $region5: #{_lambda_.1} parent=1 // loop_body
      %s15 = ssub.s32 %s10, 1
      %s16 = ssub.s32 %s10, 2
      %s23 = sadd.s32 1, %s18
      %p24 = scmp.ge.s32.totalorder %s23, 1
      %s25 = scalar_select %p24, 0, %s23
      %s26 = sadd.s32 1, %s17
      %s27 = scalar_select %p24, %s26, %s17
      %p28 = scmp.ge.s32.totalorder %s27, 2
      %s29 = scalar_select %p28, 0, %s27
      %s30 = ssub.s32 %s17, %s29
      %s31 = ssub.s32 %s18, %s25
      %s32 = sor.u32 %s30, %s31
      %p33 = scmp.eq.s32.totalorder %s32, 0
      %s35 = sadd.s32 %s34, 1
      %s36 = scalar_select %p33, %s34, %s35
      %p39 = pneg %p33
      %p40 = scmp.eq.s32.totalorder %s10, 1
      %p41 = por %p39, %p40
      %p42 = scmp.ne.s32.totalorder %s34, %s37
      %p43 = scmp.eq.s32.totalorder %s10, 0
      %p44 = por %p42, %p43
      %p45 = scmp.ne.s32.totalorder %s34, %s37
      %p46 = scmp.eq.s32.totalorder %s15, 1
      %p47 = por %p45, %p46
      %p48 = scmp.ne.s32.totalorder %s37, %s38
      %p49 = scmp.eq.s32.totalorder %s15, 0
      %p50 = por %p48, %p49
      %p51 = scmp.ne.s32.totalorder %s37, %s38
      %p52 = scmp.eq.s32.totalorder %s16, 1
      %p53 = por %p51, %p52
      %p55 = scmp.ne.s32.totalorder %s38, %s54
      %p56 = scmp.eq.s32.totalorder %s16, 0
      %p57 = por %p55, %p56
      %s58 = sadd.s32 %s18, 1
      %s59 = smul.u32 %s58, 8
      %s60 = sadd.s32 %s25, 1
      %s61 = smul.u32 %s60, 8
      %s62 = ssub.s32 %s17, %s29
      %s63 = ssub.s32 %s59, %s61
      %s64 = sor.u32 %s62, %s63
      %p65 = scmp.eq.s32.totalorder %s64, 0
      %s67 = sadd.s32 %s66, 1
      %s68 = scalar_select %p65, %s66, %s67
      %p71 = pneg %p65
      %p72 = scmp.eq.s32.totalorder %s10, 1
      %p73 = por %p71, %p72
      %p74 = scmp.ne.s32.totalorder %s66, %s69
      %p75 = scmp.eq.s32.totalorder %s10, 0
      %p76 = por %p74, %p75
      %p77 = scmp.ne.s32.totalorder %s66, %s69
      %p78 = scmp.eq.s32.totalorder %s15, 1
      %p79 = por %p77, %p78
      %p80 = scmp.ne.s32.totalorder %s69, %s70
      %p81 = scmp.eq.s32.totalorder %s15, 0
      %p82 = por %p80, %p81
      %p83 = scmp.ne.s32.totalorder %s69, %s70
      %p84 = scmp.eq.s32.totalorder %s16, 1
      %p85 = por %p83, %p84
      %p87 = scmp.ne.s32.totalorder %s70, %s86
      %p88 = scmp.eq.s32.totalorder %s16, 0
      %p89 = por %p87, %p88
      %s91 = sadd.s32 %s90, 1
      %p94 = scmp.eq.s32.totalorder %s10, 1
      %p95 = scmp.ne.s32.totalorder %s90, %s92
      %p96 = scmp.eq.s32.totalorder %s10, 0
      %p97 = por %p95, %p96
      %p98 = scmp.ne.s32.totalorder %s90, %s92
      %p99 = scmp.eq.s32.totalorder %s15, 1
      %p100 = por %p98, %p99
      %p101 = scmp.ne.s32.totalorder %s92, %s93
      %p102 = scmp.eq.s32.totalorder %s15, 0
      %p103 = por %p101, %p102
      %p104 = scmp.ne.s32.totalorder %s92, %s93
      %p105 = scmp.eq.s32.totalorder %s16, 1
      %p106 = por %p104, %p105
      %p108 = scmp.ne.s32.totalorder %s93, %s107
      %p109 = scmp.eq.s32.totalorder %s16, 0
      %p110 = por %p108, %p109
      %s112 = sadd.s32 %s111, 1
      %p115 = scmp.eq.s32.totalorder %s10, 1
      %p116 = scmp.ne.s32.totalorder %s111, %s113
      %p117 = scmp.eq.s32.totalorder %s10, 0
      %p118 = por %p116, %p117
      %p119 = scmp.ne.s32.totalorder %s111, %s113
      %p120 = scmp.eq.s32.totalorder %s15, 1
      %p121 = por %p119, %p120
      %p122 = scmp.ne.s32.totalorder %s113, %s114
      %p123 = scmp.eq.s32.totalorder %s15, 0
      %p124 = por %p122, %p123
      %p125 = scmp.ne.s32.totalorder %s113, %s114
      %p126 = scmp.eq.s32.totalorder %s16, 1
      %p127 = por %p125, %p126
      %p129 = scmp.ne.s32.totalorder %s114, %s128
      %p130 = scmp.eq.s32.totalorder %s16, 0
      %p131 = por %p129, %p130
      %s132 = ssub.s32 %s17, %s29
      %s133 = ssub.s32 %s18, %s25
      %s134 = sor.u32 %s132, %s133
      %p135 = scmp.eq.s32.totalorder %s134, 0
      %s137 = sadd.s32 %s136, 1
      %s138 = scalar_select %p135, %s136, %s137
      %p141 = pneg %p135
      %p142 = scmp.eq.s32.totalorder %s10, 1
      %p143 = por %p141, %p142
      %p144 = scmp.ne.s32.totalorder %s136, %s139
      %p145 = scmp.eq.s32.totalorder %s10, 0
      %p146 = por %p144, %p145
      %p147 = scmp.ne.s32.totalorder %s136, %s139
      %p148 = scmp.eq.s32.totalorder %s15, 1
      %p149 = por %p147, %p148
      %p150 = scmp.ne.s32.totalorder %s139, %s140
      %p151 = scmp.eq.s32.totalorder %s15, 0
      %p152 = por %p150, %p151
      %p153 = scmp.ne.s32.totalorder %s139, %s140
      %p154 = scmp.eq.s32.totalorder %s16, 1
      %p155 = por %p153, %p154
      %p157 = scmp.ne.s32.totalorder %s140, %s156
      %p158 = scmp.eq.s32.totalorder %s16, 0
      %p159 = por %p157, %p158
      %p160 = scmp.le.s32.totalorder 1, %s10
      %p161 = scmp.lt.s32.totalorder %s10, 3
      %p162 = pnand %p160, %p161
      %p163 = pneg %p162
      // Predicated region
      $region9: #{_lambda_.1} parent=5 // pred_check
        _
      $region10: #{_lambda_.1} parent=5 // pred_check_branch
        %165 = sbr.rel (%p162) target = $region12
      $region11: #{_lambda_.1} parent=5 // pred_region
        %s166 = ssub.s32 %s10, 1
        // Predicated region
        $region13: #{_lambda_.1} parent=11 // pred_check
          %p167 = pneg %p103
        $region14: #{_lambda_.1} parent=11 // pred_check_branch
          %169 = sbr.rel (%p167) target = $region16
        $region15: #{_lambda_.1} parent=11 // pred_region
          _
        $region16: #{_lambda_.1} parent=11 // pred_fallthru
          _
        // Predicated region
        $region17: #{_lambda_.1} parent=11 // pred_check
          %p170 = pneg %p124
        $region18: #{_lambda_.1} parent=11 // pred_check_branch
          %172 = sbr.rel (%p170) target = $region20
        $region19: #{_lambda_.1} parent=11 // pred_region
          _
        $region20: #{_lambda_.1} parent=11 // pred_fallthru
          _
      $region12: #{_lambda_.1} parent=5 // pred_fallthru
        _
      %p173 = scmp.lt.s32.totalorder %s10, 2
      // Predicated region
      $region21: #{_lambda_.1} parent=5 // pred_check
        %p174 = pneg %p173
      $region22: #{_lambda_.1} parent=5 // pred_check_branch
        %176 = sbr.rel (%p174) target = $region24
      $region23: #{_lambda_.1} parent=5 // pred_region
        // Predicated region
        $region25: #{_lambda_.1} parent=23 // pred_check
          %p177 = pneg %p44
        $region26: #{_lambda_.1} parent=23 // pred_check_branch
          %179 = sbr.rel (%p177) target = $region28
        $region27: #{_lambda_.1} parent=23 // pred_region
          %s180 = sand.u32 %s34, 1
          %s181 = sand.u32 %s34, 1
          %s182 = smul.addr %s181, 256
          %s183 = scalar_lea.vmem [#allocation2], %s182
          %s184 = smul.u32 8, %s18
          %s185 = ssub.s32 9, %s184
          %p186 = scmp.lt.s32.totalorder %s185, 8
          %s187 = scalar_select %p186, %s185, 8
          %s188 = smul.u32 256, %s187
          %s189 = smul.u32 %s188, 2
          %p190 = scmp.ne.s32.totalorder 0, %s189
          %s191 = smul.addr %s184, 2
          %s192 = smul.addr %s17, 72
          %s193 = sadd.s32 %s191, %s192
          %s194 = smul.addr %s193, 4
          %s195 = scalar_lea.vmem %s0, %s194
          %s196 = smul.u32 %s187, 2
          // Predicated region
          $region29: #{_lambda_.1} parent=27 // pred_check
            %p197 = pneg %p190
          $region30: #{_lambda_.1} parent=27 // pred_check_branch
            %199 = sbr.rel (%p197) target = $region32
          $region31: #{_lambda_.1} parent=27 // pred_region
            // Predicated region
            $region33: #{_lambda_.1} parent=31 // pred_check
              _
            $region34: #{_lambda_.1} parent=31 // pred_check_branch
              %201 = sbr.rel target = $region36
            $region35: #{_lambda_.1} parent=31 // pred_region
              // Predicated region
              $region55: #{_lambda_.1} parent=35 // pred_check
                _
              $region56: #{_lambda_.1} parent=35 // pred_check_branch
                %383 = sbr.rel (0) target = $region58
              $region57: #{_lambda_.1} parent=35 // pred_region
                %s384 = sshrl.u32 %s196, 4
                // While loop
                $region59: #{_lambda_.1} parent=57 // loop_pre_header
                  _
                $region60: #{_lambda_.1} parent=57 // loop_header
                  %s386 = sphi 0, %s388
                  %p387 = scmp.ge.s32.totalorder %s386, %s384
                  %s391 = sphi 0, %s396
                  %s392 = sphi %s195, %s399
                  %s393 = sphi %s183, %s400
                $region61: #{_lambda_.1} parent=57 // loop_header_branch
                  %390 = sbr.rel (%p387) target = $region65
                $region62: #{_lambda_.1} parent=57 // loop_body
                  %s394 = sadd.s32 1, %s391
                  %p395 = scmp.ge.s32.totalorder %s394, %s384
                  %s396 = scalar_select %p395, 0, %s394
                  %s397 = smul.u32 %s396, 64
                  %s398 = smul.u32 %s396, 64
                  %s399 = scalar_lea.vmem %s195, %s397
                  %s400 = scalar_lea.vmem %s183, %s398 [#allocation2]
                $region63: #{_lambda_.1} parent=57 // loop_footer
                  %s388 = sadd.s32 %s386, 1
                $region64: #{_lambda_.1} parent=57 // loop_footer_branch
                  %385 = sbr.rel target = $region60
                $region65: #{_lambda_.1} parent=57 // loop_exit
                  _
                %s401 = sshrl.u32 %s196, 4
                %s402 = sand.u32 %s196, 15
                %s403 = smul.u32 %s401, 16
                %s404 = smul.u32 4, %s403
                %s405 = scalar_lea.vmem %s195, %s404
                %s406 = smul.u32 4, %s403
                %s407 = scalar_lea.vmem %s183, %s406 [#allocation2]
                // While loop
                $region66: #{_lambda_.1} parent=57 // loop_pre_header
                  _
                $region67: #{_lambda_.1} parent=57 // loop_header
                  %s409 = sphi 0, %s411
                  %p410 = scmp.ge.s32.totalorder %s409, %s402
                  %s414 = sphi 0, %s419
                  %s415 = sphi %s405, %s422
                  %s416 = sphi %s407, %s423
                $region68: #{_lambda_.1} parent=57 // loop_header_branch
                  %413 = sbr.rel (%p410) target = $region72
                $region69: #{_lambda_.1} parent=57 // loop_body
                  %s417 = sadd.s32 1, %s414
                  %p418 = scmp.ge.s32.totalorder %s417, %s402
                  %s419 = scalar_select %p418, 0, %s417
                  %s420 = smul.u32 %s419, 4
                  %s421 = smul.u32 %s419, 4
                  %s422 = scalar_lea.vmem %s405, %s420
                  %s423 = scalar_lea.vmem %s407, %s421 [#allocation2]
                $region70: #{_lambda_.1} parent=57 // loop_footer
                  %s411 = sadd.s32 %s409, 1
                $region71: #{_lambda_.1} parent=57 // loop_footer_branch
                  %408 = sbr.rel target = $region67
                $region72: #{_lambda_.1} parent=57 // loop_exit
                  _
                %s425 = ssub.s32 16, 1
                %s426 = sshrl.u32 %s196, 4
                // While loop
                $region73: #{_lambda_.1} parent=57 // loop_pre_header
                  _
                $region74: #{_lambda_.1} parent=57 // loop_header
                  %s428 = sphi 0, %s430
                  %p429 = scmp.ge.s32.totalorder %s428, %s426
                  %s433 = sphi 0, %s566
                  %s434 = sphi %s195, %s569
                  %s435 = sphi %s183, %s570
                $region75: #{_lambda_.1} parent=57 // loop_header_branch
                  %432 = sbr.rel (%p429) target = $region79
                $region76: #{_lambda_.1} parent=57 // loop_body
                  %v436 = vld [vmem:[%s434] sm:%s425]
                  %437 = vst [vmem:[%s435] sm:%s425] %v436
                  %v438 = vld [vmem:[%s434 + $0x4] sm:%s425]
                  %439 = vst [vmem:[%s435 + $0x4] sm:%s425] %v438
                  %v440 = vld [vmem:[%s434 + $0x8] sm:%s425]
                  %441 = vst [vmem:[%s435 + $0x8] sm:%s425] %v440
                  %v442 = vld [vmem:[%s434 + $0xc] sm:%s425]
                  %443 = vst [vmem:[%s435 + $0xc] sm:%s425] %v442
                  %v444 = vld [vmem:[%s434 + $0x10] sm:%s425]
                  %445 = vst [vmem:[%s435 + $0x10] sm:%s425] %v444
                  %v446 = vld [vmem:[%s434 + $0x14] sm:%s425]
                  %447 = vst [vmem:[%s435 + $0x14] sm:%s425] %v446
                  %v448 = vld [vmem:[%s434 + $0x18] sm:%s425]
                  %449 = vst [vmem:[%s435 + $0x18] sm:%s425] %v448
                  %v450 = vld [vmem:[%s434 + $0x1c] sm:%s425]
                  %451 = vst [vmem:[%s435 + $0x1c] sm:%s425] %v450
                  %v452 = vld [vmem:[%s434 + $0x20] sm:%s425]
                  %453 = vst [vmem:[%s435 + $0x20] sm:%s425] %v452
                  %v454 = vld [vmem:[%s434 + $0x24] sm:%s425]
                  %455 = vst [vmem:[%s435 + $0x24] sm:%s425] %v454
                  %v456 = vld [vmem:[%s434 + $0x28] sm:%s425]
                  %457 = vst [vmem:[%s435 + $0x28] sm:%s425] %v456
                  %v458 = vld [vmem:[%s434 + $0x2c] sm:%s425]
                  %459 = vst [vmem:[%s435 + $0x2c] sm:%s425] %v458
                  %v460 = vld [vmem:[%s434 + $0x30] sm:%s425]
                  %461 = vst [vmem:[%s435 + $0x30] sm:%s425] %v460
                  %v462 = vld [vmem:[%s434 + $0x34] sm:%s425]
                  %463 = vst [vmem:[%s435 + $0x34] sm:%s425] %v462
                  %v464 = vld [vmem:[%s434 + $0x38] sm:%s425]
                  %465 = vst [vmem:[%s435 + $0x38] sm:%s425] %v464
                  %v466 = vld [vmem:[%s434 + $0x3c] sm:%s425]
                  %467 = vst [vmem:[%s435 + $0x3c] sm:%s425] %v466
                  %v468 = vld [vmem:[%s434 + $0x48] sm:%s425]
                  %469 = vst [vmem:[%s435 + $0x40] sm:%s425] %v468
                  %v470 = vld [vmem:[%s434 + $0x4c] sm:%s425]
                  %471 = vst [vmem:[%s435 + $0x44] sm:%s425] %v470
                  %v472 = vld [vmem:[%s434 + $0x50] sm:%s425]
                  %473 = vst [vmem:[%s435 + $0x48] sm:%s425] %v472
                  %v474 = vld [vmem:[%s434 + $0x54] sm:%s425]
                  %475 = vst [vmem:[%s435 + $0x4c] sm:%s425] %v474
                  %v476 = vld [vmem:[%s434 + $0x58] sm:%s425]
                  %477 = vst [vmem:[%s435 + $0x50] sm:%s425] %v476
                  %v478 = vld [vmem:[%s434 + $0x5c] sm:%s425]
                  %479 = vst [vmem:[%s435 + $0x54] sm:%s425] %v478
                  %v480 = vld [vmem:[%s434 + $0x60] sm:%s425]
                  %481 = vst [vmem:[%s435 + $0x58] sm:%s425] %v480
                  %v482 = vld [vmem:[%s434 + $0x64] sm:%s425]
                  %483 = vst [vmem:[%s435 + $0x5c] sm:%s425] %v482
                  %v484 = vld [vmem:[%s434 + $0x68] sm:%s425]
                  %485 = vst [vmem:[%s435 + $0x60] sm:%s425] %v484
                  %v486 = vld [vmem:[%s434 + $0x6c] sm:%s425]
                  %487 = vst [vmem:[%s435 + $0x64] sm:%s425] %v486
                  %v488 = vld [vmem:[%s434 + $0x70] sm:%s425]
                  %489 = vst [vmem:[%s435 + $0x68] sm:%s425] %v488
                  %v490 = vld [vmem:[%s434 + $0x74] sm:%s425]
                  %491 = vst [vmem:[%s435 + $0x6c] sm:%s425] %v490
                  %v492 = vld [vmem:[%s434 + $0x78] sm:%s425]
                  %493 = vst [vmem:[%s435 + $0x70] sm:%s425] %v492
                  %v494 = vld [vmem:[%s434 + $0x7c] sm:%s425]
                  %495 = vst [vmem:[%s435 + $0x74] sm:%s425] %v494
                  %v496 = vld [vmem:[%s434 + $0x80] sm:%s425]
                  %497 = vst [vmem:[%s435 + $0x78] sm:%s425] %v496
                  %v498 = vld [vmem:[%s434 + $0x84] sm:%s425]
                  %499 = vst [vmem:[%s435 + $0x7c] sm:%s425] %v498
                  %v500 = vld [vmem:[%s434 + $0x90] sm:%s425]
                  %501 = vst [vmem:[%s435 + $0x80] sm:%s425] %v500
                  %v502 = vld [vmem:[%s434 + $0x94] sm:%s425]
                  %503 = vst [vmem:[%s435 + $0x84] sm:%s425] %v502
                  %v504 = vld [vmem:[%s434 + $0x98] sm:%s425]
                  %505 = vst [vmem:[%s435 + $0x88] sm:%s425] %v504
                  %v506 = vld [vmem:[%s434 + $0x9c] sm:%s425]
                  %507 = vst [vmem:[%s435 + $0x8c] sm:%s425] %v506
                  %v508 = vld [vmem:[%s434 + $0xa0] sm:%s425]
                  %509 = vst [vmem:[%s435 + $0x90] sm:%s425] %v508
                  %v510 = vld [vmem:[%s434 + $0xa4] sm:%s425]
                  %511 = vst [vmem:[%s435 + $0x94] sm:%s425] %v510
                  %v512 = vld [vmem:[%s434 + $0xa8] sm:%s425]
                  %513 = vst [vmem:[%s435 + $0x98] sm:%s425] %v512
                  %v514 = vld [vmem:[%s434 + $0xac] sm:%s425]
                  %515 = vst [vmem:[%s435 + $0x9c] sm:%s425] %v514
                  %v516 = vld [vmem:[%s434 + $0xb0] sm:%s425]
                  %517 = vst [vmem:[%s435 + $0xa0] sm:%s425] %v516
                  %v518 = vld [vmem:[%s434 + $0xb4] sm:%s425]
                  %519 = vst [vmem:[%s435 + $0xa4] sm:%s425] %v518
                  %v520 = vld [vmem:[%s434 + $0xb8] sm:%s425]
                  %521 = vst [vmem:[%s435 + $0xa8] sm:%s425] %v520
                  %v522 = vld [vmem:[%s434 + $0xbc] sm:%s425]
                  %523 = vst [vmem:[%s435 + $0xac] sm:%s425] %v522
                  %v524 = vld [vmem:[%s434 + $0xc0] sm:%s425]
                  %525 = vst [vmem:[%s435 + $0xb0] sm:%s425] %v524
                  %v526 = vld [vmem:[%s434 + $0xc4] sm:%s425]
                  %527 = vst [vmem:[%s435 + $0xb4] sm:%s425] %v526
                  %v528 = vld [vmem:[%s434 + $0xc8] sm:%s425]
                  %529 = vst [vmem:[%s435 + $0xb8] sm:%s425] %v528
                  %v530 = vld [vmem:[%s434 + $0xcc] sm:%s425]
                  %531 = vst [vmem:[%s435 + $0xbc] sm:%s425] %v530
                  %v532 = vld [vmem:[%s434 + $0xd8] sm:%s425]
                  %533 = vst [vmem:[%s435 + $0xc0] sm:%s425] %v532
                  %v534 = vld [vmem:[%s434 + $0xdc] sm:%s425]
                  %535 = vst [vmem:[%s435 + $0xc4] sm:%s425] %v534
                  %v536 = vld [vmem:[%s434 + $0xe0] sm:%s425]
                  %537 = vst [vmem:[%s435 + $0xc8] sm:%s425] %v536
                  %v538 = vld [vmem:[%s434 + $0xe4] sm:%s425]
                  %539 = vst [vmem:[%s435 + $0xcc] sm:%s425] %v538
                  %v540 = vld [vmem:[%s434 + $0xe8] sm:%s425]
                  %541 = vst [vmem:[%s435 + $0xd0] sm:%s425] %v540
                  %v542 = vld [vmem:[%s434 + $0xec] sm:%s425]
                  %543 = vst [vmem:[%s435 + $0xd4] sm:%s425] %v542
                  %v544 = vld [vmem:[%s434 + $0xf0] sm:%s425]
                  %545 = vst [vmem:[%s435 + $0xd8] sm:%s425] %v544
                  %v546 = vld [vmem:[%s434 + $0xf4] sm:%s425]
                  %547 = vst [vmem:[%s435 + $0xdc] sm:%s425] %v546
                  %v548 = vld [vmem:[%s434 + $0xf8] sm:%s425]
                  %549 = vst [vmem:[%s435 + $0xe0] sm:%s425] %v548
                  %v550 = vld [vmem:[%s434 + $0xfc] sm:%s425]
                  %551 = vst [vmem:[%s435 + $0xe4] sm:%s425] %v550
                  %v552 = vld [vmem:[%s434 + $0x100] sm:%s425]
                  %553 = vst [vmem:[%s435 + $0xe8] sm:%s425] %v552
                  %v554 = vld [vmem:[%s434 + $0x104] sm:%s425]
                  %555 = vst [vmem:[%s435 + $0xec] sm:%s425] %v554
                  %v556 = vld [vmem:[%s434 + $0x108] sm:%s425]
                  %557 = vst [vmem:[%s435 + $0xf0] sm:%s425] %v556
                  %v558 = vld [vmem:[%s434 + $0x10c] sm:%s425]
                  %559 = vst [vmem:[%s435 + $0xf4] sm:%s425] %v558
                  %v560 = vld [vmem:[%s434 + $0x110] sm:%s425]
                  %561 = vst [vmem:[%s435 + $0xf8] sm:%s425] %v560
                  %v562 = vld [vmem:[%s434 + $0x114] sm:%s425]
                  %563 = vst [vmem:[%s435 + $0xfc] sm:%s425] %v562
                  %s564 = sadd.s32 1, %s433
                  %p565 = scmp.ge.s32.totalorder %s564, %s426
                  %s566 = scalar_select %p565, 0, %s564
                  %s567 = smul.u32 %s566, 64
                  %s568 = smul.u32 %s566, 64
                  %s569 = scalar_lea.vmem %s195, %s567
                  %s570 = scalar_lea.vmem %s183, %s568 [#allocation2]
                $region77: #{_lambda_.1} parent=57 // loop_footer
                  %s430 = sadd.s32 %s428, 1
                $region78: #{_lambda_.1} parent=57 // loop_footer_branch
                  %427 = sbr.rel target = $region74
                $region79: #{_lambda_.1} parent=57 // loop_exit
                  _
                %s571 = sshrl.u32 %s196, 4
                %s572 = sand.u32 %s196, 15
                %s573 = smul.u32 %s571, 16
                %s574 = smul.u32 4, %s573
                %s575 = scalar_lea.vmem %s195, %s574
                %s576 = smul.u32 4, %s573
                %s577 = scalar_lea.vmem %s183, %s576 [#allocation2]
                // While loop
                $region80: #{_lambda_.1} parent=57 // loop_pre_header
                  _
                $region81: #{_lambda_.1} parent=57 // loop_header
                  %s579 = sphi 0, %s581
                  %p580 = scmp.ge.s32.totalorder %s579, %s572
                  %s584 = sphi 0, %s597
                  %s585 = sphi %s575, %s600
                  %s586 = sphi %s577, %s601
                $region82: #{_lambda_.1} parent=57 // loop_header_branch
                  %583 = sbr.rel (%p580) target = $region86
                $region83: #{_lambda_.1} parent=57 // loop_body
                  %v587 = vld [vmem:[%s585] sm:%s425]
                  %588 = vst [vmem:[%s586] sm:%s425] %v587
                  %v589 = vld [vmem:[%s585 + $0x48] sm:%s425]
                  %590 = vst [vmem:[%s586 + $0x40] sm:%s425] %v589
                  %v591 = vld [vmem:[%s585 + $0x90] sm:%s425]
                  %592 = vst [vmem:[%s586 + $0x80] sm:%s425] %v591
                  %v593 = vld [vmem:[%s585 + $0xd8] sm:%s425]
                  %594 = vst [vmem:[%s586 + $0xc0] sm:%s425] %v593
                  %s595 = sadd.s32 1, %s584
                  %p596 = scmp.ge.s32.totalorder %s595, %s572
                  %s597 = scalar_select %p596, 0, %s595
                  %s598 = smul.u32 %s597, 4
                  %s599 = smul.u32 %s597, 4
                  %s600 = scalar_lea.vmem %s575, %s598
                  %s601 = scalar_lea.vmem %s577, %s599 [#allocation2]
                $region84: #{_lambda_.1} parent=57 // loop_footer
                  %s581 = sadd.s32 %s579, 1
                $region85: #{_lambda_.1} parent=57 // loop_footer_branch
                  %578 = sbr.rel target = $region81
                $region86: #{_lambda_.1} parent=57 // loop_exit
                  _
              $region58: #{_lambda_.1} parent=35 // pred_fallthru
                _
            $region36: #{_lambda_.1} parent=31 // pred_fallthru
              _
            // Predicated region
            $region37: #{_lambda_.1} parent=31 // pred_check
              _
            $region38: #{_lambda_.1} parent=31 // pred_check_branch
              %203 = sbr.rel (0) target = $region40
            $region39: #{_lambda_.1} parent=31 // pred_region
              %s205 = ssub.s32 16, 1
              %s206 = sshrl.u32 %s196, 4
              // While loop
              $region41: #{_lambda_.1} parent=39 // loop_pre_header
                _
              $region42: #{_lambda_.1} parent=39 // loop_header
                %s208 = sphi 0, %s210
                %p209 = scmp.ge.s32.totalorder %s208, %s206
                %s213 = sphi 0, %s346
                %s214 = sphi %s195, %s349
                %s215 = sphi %s183, %s350
              $region43: #{_lambda_.1} parent=39 // loop_header_branch
                %212 = sbr.rel (%p209) target = $region47
              $region44: #{_lambda_.1} parent=39 // loop_body
                %v216 = vld [vmem:[%s214] sm:%s205]
                %217 = vst [vmem:[%s215] sm:%s205] %v216
                %v218 = vld [vmem:[%s214 + $0x4] sm:%s205]
                %219 = vst [vmem:[%s215 + $0x4] sm:%s205] %v218
                %v220 = vld [vmem:[%s214 + $0x8] sm:%s205]
                %221 = vst [vmem:[%s215 + $0x8] sm:%s205] %v220
                %v222 = vld [vmem:[%s214 + $0xc] sm:%s205]
                %223 = vst [vmem:[%s215 + $0xc] sm:%s205] %v222
                %v224 = vld [vmem:[%s214 + $0x10] sm:%s205]
                %225 = vst [vmem:[%s215 + $0x10] sm:%s205] %v224
                %v226 = vld [vmem:[%s214 + $0x14] sm:%s205]
                %227 = vst [vmem:[%s215 + $0x14] sm:%s205] %v226
                %v228 = vld [vmem:[%s214 + $0x18] sm:%s205]
                %229 = vst [vmem:[%s215 + $0x18] sm:%s205] %v228
                %v230 = vld [vmem:[%s214 + $0x1c] sm:%s205]
                %231 = vst [vmem:[%s215 + $0x1c] sm:%s205] %v230
                %v232 = vld [vmem:[%s214 + $0x20] sm:%s205]
                %233 = vst [vmem:[%s215 + $0x20] sm:%s205] %v232
                %v234 = vld [vmem:[%s214 + $0x24] sm:%s205]
                %235 = vst [vmem:[%s215 + $0x24] sm:%s205] %v234
                %v236 = vld [vmem:[%s214 + $0x28] sm:%s205]
                %237 = vst [vmem:[%s215 + $0x28] sm:%s205] %v236
                %v238 = vld [vmem:[%s214 + $0x2c] sm:%s205]
                %239 = vst [vmem:[%s215 + $0x2c] sm:%s205] %v238
                %v240 = vld [vmem:[%s214 + $0x30] sm:%s205]
                %241 = vst [vmem:[%s215 + $0x30] sm:%s205] %v240
                %v242 = vld [vmem:[%s214 + $0x34] sm:%s205]
                %243 = vst [vmem:[%s215 + $0x34] sm:%s205] %v242
                %v244 = vld [vmem:[%s214 + $0x38] sm:%s205]
                %245 = vst [vmem:[%s215 + $0x38] sm:%s205] %v244
                %v246 = vld [vmem:[%s214 + $0x3c] sm:%s205]
                %247 = vst [vmem:[%s215 + $0x3c] sm:%s205] %v246
                %v248 = vld [vmem:[%s214 + $0x48] sm:%s205]
                %249 = vst [vmem:[%s215 + $0x40] sm:%s205] %v248
                %v250 = vld [vmem:[%s214 + $0x4c] sm:%s205]
                %251 = vst [vmem:[%s215 + $0x44] sm:%s205] %v250
                %v252 = vld [vmem:[%s214 + $0x50] sm:%s205]
                %253 = vst [vmem:[%s215 + $0x48] sm:%s205] %v252
                %v254 = vld [vmem:[%s214 + $0x54] sm:%s205]
                %255 = vst [vmem:[%s215 + $0x4c] sm:%s205] %v254
                %v256 = vld [vmem:[%s214 + $0x58] sm:%s205]
                %257 = vst [vmem:[%s215 + $0x50] sm:%s205] %v256
                %v258 = vld [vmem:[%s214 + $0x5c] sm:%s205]
                %259 = vst [vmem:[%s215 + $0x54] sm:%s205] %v258
                %v260 = vld [vmem:[%s214 + $0x60] sm:%s205]
                %261 = vst [vmem:[%s215 + $0x58] sm:%s205] %v260
                %v262 = vld [vmem:[%s214 + $0x64] sm:%s205]
                %263 = vst [vmem:[%s215 + $0x5c] sm:%s205] %v262
                %v264 = vld [vmem:[%s214 + $0x68] sm:%s205]
                %265 = vst [vmem:[%s215 + $0x60] sm:%s205] %v264
                %v266 = vld [vmem:[%s214 + $0x6c] sm:%s205]
                %267 = vst [vmem:[%s215 + $0x64] sm:%s205] %v266
                %v268 = vld [vmem:[%s214 + $0x70] sm:%s205]
                %269 = vst [vmem:[%s215 + $0x68] sm:%s205] %v268
                %v270 = vld [vmem:[%s214 + $0x74] sm:%s205]
                %271 = vst [vmem:[%s215 + $0x6c] sm:%s205] %v270
                %v272 = vld [vmem:[%s214 + $0x78] sm:%s205]
                %273 = vst [vmem:[%s215 + $0x70] sm:%s205] %v272
                %v274 = vld [vmem:[%s214 + $0x7c] sm:%s205]
                %275 = vst [vmem:[%s215 + $0x74] sm:%s205] %v274
                %v276 = vld [vmem:[%s214 + $0x80] sm:%s205]
                %277 = vst [vmem:[%s215 + $0x78] sm:%s205] %v276
                %v278 = vld [vmem:[%s214 + $0x84] sm:%s205]
                %279 = vst [vmem:[%s215 + $0x7c] sm:%s205] %v278
                %v280 = vld [vmem:[%s214 + $0x90] sm:%s205]
                %281 = vst [vmem:[%s215 + $0x80] sm:%s205] %v280
                %v282 = vld [vmem:[%s214 + $0x94] sm:%s205]
                %283 = vst [vmem:[%s215 + $0x84] sm:%s205] %v282
                %v284 = vld [vmem:[%s214 + $0x98] sm:%s205]
                %285 = vst [vmem:[%s215 + $0x88] sm:%s205] %v284
                %v286 = vld [vmem:[%s214 + $0x9c] sm:%s205]
                %287 = vst [vmem:[%s215 + $0x8c] sm:%s205] %v286
                %v288 = vld [vmem:[%s214 + $0xa0] sm:%s205]
                %289 = vst [vmem:[%s215 + $0x90] sm:%s205] %v288
                %v290 = vld [vmem:[%s214 + $0xa4] sm:%s205]
                %291 = vst [vmem:[%s215 + $0x94] sm:%s205] %v290
                %v292 = vld [vmem:[%s214 + $0xa8] sm:%s205]
                %293 = vst [vmem:[%s215 + $0x98] sm:%s205] %v292
                %v294 = vld [vmem:[%s214 + $0xac] sm:%s205]
                %295 = vst [vmem:[%s215 + $0x9c] sm:%s205] %v294
                %v296 = vld [vmem:[%s214 + $0xb0] sm:%s205]
                %297 = vst [vmem:[%s215 + $0xa0] sm:%s205] %v296
                %v298 = vld [vmem:[%s214 + $0xb4] sm:%s205]
                %299 = vst [vmem:[%s215 + $0xa4] sm:%s205] %v298
                %v300 = vld [vmem:[%s214 + $0xb8] sm:%s205]
                %301 = vst [vmem:[%s215 + $0xa8] sm:%s205] %v300
                %v302 = vld [vmem:[%s214 + $0xbc] sm:%s205]
                %303 = vst [vmem:[%s215 + $0xac] sm:%s205] %v302
                %v304 = vld [vmem:[%s214 + $0xc0] sm:%s205]
                %305 = vst [vmem:[%s215 + $0xb0] sm:%s205] %v304
                %v306 = vld [vmem:[%s214 + $0xc4] sm:%s205]
                %307 = vst [vmem:[%s215 + $0xb4] sm:%s205] %v306
                %v308 = vld [vmem:[%s214 + $0xc8] sm:%s205]
                %309 = vst [vmem:[%s215 + $0xb8] sm:%s205] %v308
                %v310 = vld [vmem:[%s214 + $0xcc] sm:%s205]
                %311 = vst [vmem:[%s215 + $0xbc] sm:%s205] %v310
                %v312 = vld [vmem:[%s214 + $0xd8] sm:%s205]
                %313 = vst [vmem:[%s215 + $0xc0] sm:%s205] %v312
                %v314 = vld [vmem:[%s214 + $0xdc] sm:%s205]
                %315 = vst [vmem:[%s215 + $0xc4] sm:%s205] %v314
                %v316 = vld [vmem:[%s214 + $0xe0] sm:%s205]
                %317 = vst [vmem:[%s215 + $0xc8] sm:%s205] %v316
                %v318 = vld [vmem:[%s214 + $0xe4] sm:%s205]
                %319 = vst [vmem:[%s215 + $0xcc] sm:%s205] %v318
                %v320 = vld [vmem:[%s214 + $0xe8] sm:%s205]
                %321 = vst [vmem:[%s215 + $0xd0] sm:%s205] %v320
                %v322 = vld [vmem:[%s214 + $0xec] sm:%s205]
                %323 = vst [vmem:[%s215 + $0xd4] sm:%s205] %v322
                %v324 = vld [vmem:[%s214 + $0xf0] sm:%s205]
                %325 = vst [vmem:[%s215 + $0xd8] sm:%s205] %v324
                %v326 = vld [vmem:[%s214 + $0xf4] sm:%s205]
                %327 = vst [vmem:[%s215 + $0xdc] sm:%s205] %v326
                %v328 = vld [vmem:[%s214 + $0xf8] sm:%s205]
                %329 = vst [vmem:[%s215 + $0xe0] sm:%s205] %v328
                %v330 = vld [vmem:[%s214 + $0xfc] sm:%s205]
                %331 = vst [vmem:[%s215 + $0xe4] sm:%s205] %v330
                %v332 = vld [vmem:[%s214 + $0x100] sm:%s205]
                %333 = vst [vmem:[%s215 + $0xe8] sm:%s205] %v332
                %v334 = vld [vmem:[%s214 + $0x104] sm:%s205]
                %335 = vst [vmem:[%s215 + $0xec] sm:%s205] %v334
                %v336 = vld [vmem:[%s214 + $0x108] sm:%s205]
                %337 = vst [vmem:[%s215 + $0xf0] sm:%s205] %v336
                %v338 = vld [vmem:[%s214 + $0x10c] sm:%s205]
                %339 = vst [vmem:[%s215 + $0xf4] sm:%s205] %v338
                %v340 = vld [vmem:[%s214 + $0x110] sm:%s205]
                %341 = vst [vmem:[%s215 + $0xf8] sm:%s205] %v340
                %v342 = vld [vmem:[%s214 + $0x114] sm:%s205]
                %343 = vst [vmem:[%s215 + $0xfc] sm:%s205] %v342
                %s344 = sadd.s32 1, %s213
                %p345 = scmp.ge.s32.totalorder %s344, %s206
                %s346 = scalar_select %p345, 0, %s344
                %s347 = smul.u32 %s346, 64
                %s348 = smul.u32 %s346, 64
                %s349 = scalar_lea.vmem %s195, %s347
                %s350 = scalar_lea.vmem %s183, %s348 [#allocation2]
              $region45: #{_lambda_.1} parent=39 // loop_footer
                %s210 = sadd.s32 %s208, 1
              $region46: #{_lambda_.1} parent=39 // loop_footer_branch
                %207 = sbr.rel target = $region42
              $region47: #{_lambda_.1} parent=39 // loop_exit
                _
              %s351 = sshrl.u32 %s196, 4
              %s352 = sand.u32 %s196, 15
              %s353 = smul.u32 %s351, 16
              %s354 = smul.u32 4, %s353
              %s355 = scalar_lea.vmem %s195, %s354
              %s356 = smul.u32 4, %s353
              %s357 = scalar_lea.vmem %s183, %s356 [#allocation2]
              // While loop
              $region48: #{_lambda_.1} parent=39 // loop_pre_header
                _
              $region49: #{_lambda_.1} parent=39 // loop_header
                %s359 = sphi 0, %s361
                %p360 = scmp.ge.s32.totalorder %s359, %s352
                %s364 = sphi 0, %s377
                %s365 = sphi %s355, %s380
                %s366 = sphi %s357, %s381
              $region50: #{_lambda_.1} parent=39 // loop_header_branch
                %363 = sbr.rel (%p360) target = $region54
              $region51: #{_lambda_.1} parent=39 // loop_body
                %v367 = vld [vmem:[%s365] sm:%s205]
                %368 = vst [vmem:[%s366] sm:%s205] %v367
                %v369 = vld [vmem:[%s365 + $0x48] sm:%s205]
                %370 = vst [vmem:[%s366 + $0x40] sm:%s205] %v369
                %v371 = vld [vmem:[%s365 + $0x90] sm:%s205]
                %372 = vst [vmem:[%s366 + $0x80] sm:%s205] %v371
                %v373 = vld [vmem:[%s365 + $0xd8] sm:%s205]
                %374 = vst [vmem:[%s366 + $0xc0] sm:%s205] %v373
                %s375 = sadd.s32 1, %s364
                %p376 = scmp.ge.s32.totalorder %s375, %s352
                %s377 = scalar_select %p376, 0, %s375
                %s378 = smul.u32 %s377, 4
                %s379 = smul.u32 %s377, 4
                %s380 = scalar_lea.vmem %s355, %s378
                %s381 = scalar_lea.vmem %s357, %s379 [#allocation2]
              $region52: #{_lambda_.1} parent=39 // loop_footer
                %s361 = sadd.s32 %s359, 1
              $region53: #{_lambda_.1} parent=39 // loop_footer_branch
                %358 = sbr.rel target = $region49
              $region54: #{_lambda_.1} parent=39 // loop_exit
                _
            $region40: #{_lambda_.1} parent=31 // pred_fallthru
              _
          $region32: #{_lambda_.1} parent=27 // pred_fallthru
            _
          %602 = vnop
        $region28: #{_lambda_.1} parent=23 // pred_fallthru
          _
        // Predicated region
        $region87: #{_lambda_.1} parent=23 // pred_check
          %p603 = pneg %p76
        $region88: #{_lambda_.1} parent=23 // pred_check_branch
          %605 = sbr.rel (%p603) target = $region90
        $region89: #{_lambda_.1} parent=23 // pred_region
          %s606 = sand.u32 %s66, 1
          %s607 = sand.u32 %s66, 1
          %s608 = smul.addr %s607, 16
          %s609 = scalar_lea.vmem [#allocation3], %s608
          %s610 = sadd.s32 %s18, 1
          %s611 = smul.u32 %s610, 8
          %s612 = smul.addr %s611, 2
          %s613 = smul.addr %s17, 72
          %s614 = sadd.s32 %s612, %s613
          %s615 = smul.addr %s614, 4
          %s616 = scalar_lea.vmem %s1, %s615
          // Predicated region
          $region91: #{_lambda_.1} parent=89 // pred_check
            _
          $region92: #{_lambda_.1} parent=89 // pred_check_branch
            %618 = sbr.rel (0) target = $region94
          $region93: #{_lambda_.1} parent=89 // pred_region
            // Predicated region
            $region95: #{_lambda_.1} parent=93 // pred_check
              _
            $region96: #{_lambda_.1} parent=93 // pred_check_branch
              %620 = sbr.rel target = $region98
            $region97: #{_lambda_.1} parent=93 // pred_region
              // Predicated region
              $region110: #{_lambda_.1} parent=97 // pred_check
                _
              $region111: #{_lambda_.1} parent=97 // pred_check_branch
                %642 = sbr.rel (0) target = $region113
              $region112: #{_lambda_.1} parent=97 // pred_region
                loop: start=0, step=1, limit=1
                $region114: #{_lambda_.1} parent=112 // loop_pre_header
                  _
                $region115: #{_lambda_.1} parent=112 // loop_header
                  %s644 = sphi 0, %s648
                  %p645 = scmp.ge.s32.totalorder %s644, 1
                  %s649 = sphi %s616, %s616
                  %s650 = sphi %s609, %s609
                $region116: #{_lambda_.1} parent=112 // loop_header_branch
                  %647 = sbr.rel (%p645) target = $region120
                $region117: #{_lambda_.1} parent=112 // loop_body
                  _
                $region118: #{_lambda_.1} parent=112 // loop_footer
                  %s648 = sadd.s32 1, %s644
                $region119: #{_lambda_.1} parent=112 // loop_footer_branch
                  %643 = sbr.rel target = $region115
                $region120: #{_lambda_.1} parent=112 // loop_exit
                  _
                %s652 = ssub.s32 16, 1
                loop: start=0, step=1, limit=1
                $region121: #{_lambda_.1} parent=112 // loop_pre_header
                  _
                $region122: #{_lambda_.1} parent=112 // loop_header
                  %s654 = sphi 0, %s658
                  %p655 = scmp.ge.s32.totalorder %s654, 1
                  %s659 = sphi %s616, %s616
                  %s660 = sphi %s609, %s609
                $region123: #{_lambda_.1} parent=112 // loop_header_branch
                  %657 = sbr.rel (%p655) target = $region127
                $region124: #{_lambda_.1} parent=112 // loop_body
                  %v661 = vld [vmem:[%s659] sm:%s652]
                  %662 = vst [vmem:[%s660] sm:%s652] %v661
                  %v663 = vld [vmem:[%s659 + $0x4] sm:%s652]
                  %664 = vst [vmem:[%s660 + $0x4] sm:%s652] %v663
                  %v665 = vld [vmem:[%s659 + $0x48] sm:%s652]
                  %666 = vst [vmem:[%s660 + $0x8] sm:%s652] %v665
                  %v667 = vld [vmem:[%s659 + $0x4c] sm:%s652]
                  %668 = vst [vmem:[%s660 + $0xc] sm:%s652] %v667
                $region125: #{_lambda_.1} parent=112 // loop_footer
                  %s658 = sadd.s32 1, %s654
                $region126: #{_lambda_.1} parent=112 // loop_footer_branch
                  %653 = sbr.rel target = $region122
                $region127: #{_lambda_.1} parent=112 // loop_exit
                  _
              $region113: #{_lambda_.1} parent=97 // pred_fallthru
                _
            $region98: #{_lambda_.1} parent=93 // pred_fallthru
              _
            // Predicated region
            $region99: #{_lambda_.1} parent=93 // pred_check
              _
            $region100: #{_lambda_.1} parent=93 // pred_check_branch
              %622 = sbr.rel (0) target = $region102
            $region101: #{_lambda_.1} parent=93 // pred_region
              %s624 = ssub.s32 16, 1
              loop: start=0, step=1, limit=1
              $region103: #{_lambda_.1} parent=101 // loop_pre_header
                _
              $region104: #{_lambda_.1} parent=101 // loop_header
                %s626 = sphi 0, %s630
                %p627 = scmp.ge.s32.totalorder %s626, 1
                %s631 = sphi %s616, %s616
                %s632 = sphi %s609, %s609
              $region105: #{_lambda_.1} parent=101 // loop_header_branch
                %629 = sbr.rel (%p627) target = $region109
              $region106: #{_lambda_.1} parent=101 // loop_body
                %v633 = vld [vmem:[%s631] sm:%s624]
                %634 = vst [vmem:[%s632] sm:%s624] %v633
                %v635 = vld [vmem:[%s631 + $0x4] sm:%s624]
                %636 = vst [vmem:[%s632 + $0x4] sm:%s624] %v635
                %v637 = vld [vmem:[%s631 + $0x48] sm:%s624]
                %638 = vst [vmem:[%s632 + $0x8] sm:%s624] %v637
                %v639 = vld [vmem:[%s631 + $0x4c] sm:%s624]
                %640 = vst [vmem:[%s632 + $0xc] sm:%s624] %v639
              $region107: #{_lambda_.1} parent=101 // loop_footer
                %s630 = sadd.s32 1, %s626
              $region108: #{_lambda_.1} parent=101 // loop_footer_branch
                %625 = sbr.rel target = $region104
              $region109: #{_lambda_.1} parent=101 // loop_exit
                _
            $region102: #{_lambda_.1} parent=93 // pred_fallthru
              _
          $region94: #{_lambda_.1} parent=89 // pred_fallthru
            _
          %669 = vnop
        $region90: #{_lambda_.1} parent=23 // pred_fallthru
          _
      $region24: #{_lambda_.1} parent=5 // pred_fallthru
        _
      %p670 = scmp.le.s32.totalorder 1, %s10
      %p671 = scmp.lt.s32.totalorder %s10, 3
      %p672 = pnand %p670, %p671
      %p673 = pneg %p672
      // Predicated region
      $region128: #{_lambda_.1} parent=5 // pred_check
        _
      $region129: #{_lambda_.1} parent=5 // pred_check_branch
        %675 = sbr.rel (%p672) target = $region131
      $region130: #{_lambda_.1} parent=5 // pred_region
        %s676 = ssub.s32 %s10, 1
        %s677 = sand.u32 %s37, 1
        %s678 = sand.u32 %s37, 1
        %s679 = smul.addr %s678, 256
        %s680 = scalar_lea.vmem [#allocation2], %s679
        // Predicated region
        $region132: #{_lambda_.1} parent=130 // pred_check
          %p681 = pneg %p50
        $region133: #{_lambda_.1} parent=130 // pred_check_branch
          %683 = sbr.rel (%p681) target = $region135
        $region134: #{_lambda_.1} parent=130 // pred_region
          _
        $region135: #{_lambda_.1} parent=130 // pred_fallthru
          _
        %s684 = sand.u32 %s69, 1
        %s685 = sand.u32 %s69, 1
        %s686 = smul.addr %s685, 16
        %s687 = scalar_lea.vmem [#allocation3], %s686
        // Predicated region
        $region136: #{_lambda_.1} parent=130 // pred_check
          %p688 = pneg %p82
        $region137: #{_lambda_.1} parent=130 // pred_check_branch
          %690 = sbr.rel (%p688) target = $region139
        $region138: #{_lambda_.1} parent=130 // pred_region
          _
        $region139: #{_lambda_.1} parent=130 // pred_fallthru
          _
        %s691 = sand.u32 %s37, 1
        %s692 = sand.u32 %s37, 1
        %s693 = smul.addr %s692, 256
        %s694 = scalar_lea.vmem [#allocation2], %s693
        %p695 = pneg %p50
        %p696 = pneg %p47
        %s697 = sand.u32 %s69, 1
        %s698 = sand.u32 %s69, 1
        %s699 = smul.addr %s698, 16
        %s700 = scalar_lea.vmem [#allocation3], %s699
        %p701 = pneg %p82
        %p702 = pneg %p79
        %p703 = pneg %p103
        %p704 = pneg %p100
        %p705 = pneg %p124
        %p706 = pneg %p121
        %p707 = pneg %p152
        %p708 = pneg %p149
        %s709 = smul.u32 8, %s20
        %p710 = scmp.lt.s32.totalorder %s19, 1
        %s711 = scalar_select %p710, %s19, 1
        %p712 = scmp.lt.s32.totalorder %s709, 7
        %s713 = scalar_select %p712, %s709, 7
        %s714 = smul.addr %s711, 8
        %s715 = sadd.s32 %s713, %s714
        %s716 = smul.addr %s715, 8
        %s717 = scalar_lea.vmem %s4, %s716
        %s718 = smul.u32 8, %s20
        %s719 = ssub.s32 9, %s718
        %p720 = scmp.lt.s32.totalorder %s719, 8
        %s721 = scalar_select %p720, %s719, 8
        %s722 = smul.u32 256, %s721
        %s723 = smul.u32 %s722, 2
        %s724 = sadd.s32 %s20, 1
        %s725 = smul.u32 %s724, 8
        %s726 = smul.u32 8, %s20
        %p727 = scmp.lt.s32.totalorder %s19, 1
        %s728 = scalar_select %p727, %s19, 1
        %p729 = scmp.lt.s32.totalorder %s726, 7
        %s730 = scalar_select %p729, %s726, 7
        %s731 = smul.addr %s728, 8
        %s732 = sadd.s32 %s730, %s731
        %s733 = smul.addr %s732, 8
        %s734 = scalar_lea.vmem %s4, %s733
        %s735 = smul.u32 8, %s20
        %v737 = vld [vmem:[%s680] sm:$0xf]
        %v738 = vld [vmem:[%s680 + $0x4] sm:$0x1]
        %v739 = vld [vmem:[%s680 + $0x8] sm:$0xf]
        %v740 = vld [vmem:[%s680 + $0xc] sm:$0x1]
        %v741 = vld [vmem:[%s680 + $0x10] sm:$0xf]
        %v742 = vld [vmem:[%s680 + $0x14] sm:$0x1]
        %v743 = vld [vmem:[%s680 + $0x18] sm:$0xf]
        %v744 = vld [vmem:[%s680 + $0x1c] sm:$0x1]
        %v745 = vld [vmem:[%s680 + $0x20] sm:$0xf]
        %v746 = vld [vmem:[%s680 + $0x24] sm:$0x1]
        %v747 = vld [vmem:[%s680 + $0x28] sm:$0xf]
        %v748 = vld [vmem:[%s680 + $0x2c] sm:$0x1]
        %v749 = vld [vmem:[%s680 + $0x30] sm:$0xf]
        %v750 = vld [vmem:[%s680 + $0x34] sm:$0x1]
        %v751 = vld [vmem:[%s680 + $0x38] sm:$0xf]
        %v752 = vld [vmem:[%s680 + $0x3c] sm:$0x1]
        %s753 = scalar_lea.vmem %s680, 64 [#allocation2]
        %v754 = vld [vmem:[%s753] sm:$0xf]
        %v755 = vld [vmem:[%s753 + $0x8] sm:$0xf]
        %v756 = vld [vmem:[%s753 + $0x10] sm:$0xf]
        %v757 = vld [vmem:[%s753 + $0x18] sm:$0xf]
        %v758 = vld [vmem:[%s753 + $0x20] sm:$0xf]
        %v759 = vld [vmem:[%s753 + $0x28] sm:$0xf]
        %v760 = vld [vmem:[%s753 + $0x30] sm:$0xf]
        %v761 = vld [vmem:[%s753 + $0x38] sm:$0xf]
        %s762 = scalar_lea.vmem %s680, 128 [#allocation2]
        %v763 = vld [vmem:[%s762] sm:$0xf]
        %v764 = vld [vmem:[%s762 + $0x4] sm:$0x1]
        %v765 = vld [vmem:[%s762 + $0x8] sm:$0xf]
        %v766 = vld [vmem:[%s762 + $0xc] sm:$0x1]
        %v767 = vld [vmem:[%s762 + $0x10] sm:$0xf]
        %v768 = vld [vmem:[%s762 + $0x14] sm:$0x1]
        %v769 = vld [vmem:[%s762 + $0x18] sm:$0xf]
        %v770 = vld [vmem:[%s762 + $0x1c] sm:$0x1]
        %v771 = vld [vmem:[%s762 + $0x20] sm:$0xf]
        %v772 = vld [vmem:[%s762 + $0x24] sm:$0x1]
        %v773 = vld [vmem:[%s762 + $0x28] sm:$0xf]
        %v774 = vld [vmem:[%s762 + $0x2c] sm:$0x1]
        %v775 = vld [vmem:[%s762 + $0x30] sm:$0xf]
        %v776 = vld [vmem:[%s762 + $0x34] sm:$0x1]
        %v777 = vld [vmem:[%s762 + $0x38] sm:$0xf]
        %v778 = vld [vmem:[%s762 + $0x3c] sm:$0x1]
        %s779 = scalar_lea.vmem %s680, 192 [#allocation2]
        %v780 = vld [vmem:[%s779] sm:$0xf]
        %v781 = vld [vmem:[%s779 + $0x8] sm:$0xf]
        %v782 = vld [vmem:[%s779 + $0x10] sm:$0xf]
        %v783 = vld [vmem:[%s779 + $0x18] sm:$0xf]
        %v784 = vld [vmem:[%s779 + $0x20] sm:$0xf]
        %v785 = vld [vmem:[%s779 + $0x28] sm:$0xf]
        %v786 = vld [vmem:[%s779 + $0x30] sm:$0xf]
        %v787 = vld [vmem:[%s779 + $0x38] sm:$0xf]
        %v788 = vld [vmem:[%s2] sm:$0xf]
        %v789 = vld [vmem:[%s2 + $0x4] sm:$0x3]
        %s790 = scalar_lea.vmem %s2, 8
        %v791 = vld [vmem:[%s790] sm:$0xf]
        %v792 = vld [vmem:[%s790 + $0x4] sm:$0x3]
        %s793 = scalar_lea.vmem %s2, 16
        %v794 = vld [vmem:[%s793] sm:$0xf]
        %v795 = vld [vmem:[%s793 + $0x4] sm:$0x3]
        %v796 = vld [vmem:[%s3] sm:$0x1]
        %v805 = vunpack.c.l.b16 %v754
        %v806 = vunpack.c.l.b16 %v755
        %v807 = vunpack.c.l.b16 %v756
        %v808 = vunpack.c.l.b16 %v757
        %v809 = vunpack.c.l.b16 %v758
        %v810 = vunpack.c.l.b16 %v759
        %v811 = vunpack.c.l.b16 %v760
        %v812 = vunpack.c.l.b16 %v761
        %v813 = vpack.c.b16 %v805, %v805
        %v814 = vpack.c.b16 %v806, %v806
        %v815 = vpack.c.b16 %v807, %v807
        %v816 = vpack.c.b16 %v808, %v808
        %v817 = vpack.c.b16 %v809, %v809
        %v818 = vpack.c.b16 %v810, %v810
        %v819 = vpack.c.b16 %v811, %v811
        %v820 = vpack.c.b16 %v812, %v812
        %821 = vrot.lane.b32.xlu0 %v813, 4
        %v822 = vpop.permute.xlu0 %821
        %823 = vrot.lane.b32.xlu0 %v814, 4
        %v824 = vpop.permute.xlu0 %823
        %825 = vrot.lane.b32.xlu0 %v815, 4
        %v826 = vpop.permute.xlu0 %825
        %827 = vrot.lane.b32.xlu0 %v816, 4
        %v828 = vpop.permute.xlu0 %827
        %829 = vrot.lane.b32.xlu0 %v817, 4
        %v830 = vpop.permute.xlu0 %829
        %831 = vrot.lane.b32.xlu0 %v818, 4
        %v832 = vpop.permute.xlu0 %831
        %833 = vrot.lane.b32.xlu0 %v819, 4
        %v834 = vpop.permute.xlu0 %833
        %835 = vrot.lane.b32.xlu0 %v820, 4
        %v836 = vpop.permute.xlu0 %835
        %v853 = vunpack.c.l.b16 %v737
        %v854 = vunpack.c.l.b16 %v738
        %v855 = vunpack.c.l.b16 %v739
        %v856 = vunpack.c.l.b16 %v740
        %v857 = vunpack.c.l.b16 %v741
        %v858 = vunpack.c.l.b16 %v742
        %v859 = vunpack.c.l.b16 %v743
        %v860 = vunpack.c.l.b16 %v744
        %v861 = vunpack.c.l.b16 %v745
        %v862 = vunpack.c.l.b16 %v746
        %v863 = vunpack.c.l.b16 %v747
        %v864 = vunpack.c.l.b16 %v748
        %v865 = vunpack.c.l.b16 %v749
        %v866 = vunpack.c.l.b16 %v750
        %v867 = vunpack.c.l.b16 %v751
        %v868 = vunpack.c.l.b16 %v752
        %v869 = vpack.c.b16 %v854, %v853
        %v870 = vpack.c.b16 %v856, %v855
        %v871 = vpack.c.b16 %v858, %v857
        %v872 = vpack.c.b16 %v860, %v859
        %v873 = vpack.c.b16 %v862, %v861
        %v874 = vpack.c.b16 %v864, %v863
        %v875 = vpack.c.b16 %v866, %v865
        %v876 = vpack.c.b16 %v868, %v867
        %v878 = vshrl.u32 %v869, 16
        %v880 = vshll.u32 %v869, 16
        %v882 = vrot.slane %v880, 1
        %v883 = vor.u32 %v878, %v882
        %v885 = vshrl.u32 %v870, 16
        %v887 = vshll.u32 %v870, 16
        %v889 = vrot.slane %v887, 1
        %v890 = vor.u32 %v885, %v889
        %v892 = vshrl.u32 %v871, 16
        %v894 = vshll.u32 %v871, 16
        %v896 = vrot.slane %v894, 1
        %v897 = vor.u32 %v892, %v896
        %v899 = vshrl.u32 %v872, 16
        %v901 = vshll.u32 %v872, 16
        %v903 = vrot.slane %v901, 1
        %v904 = vor.u32 %v899, %v903
        %v906 = vshrl.u32 %v873, 16
        %v908 = vshll.u32 %v873, 16
        %v910 = vrot.slane %v908, 1
        %v911 = vor.u32 %v906, %v910
        %v913 = vshrl.u32 %v874, 16
        %v915 = vshll.u32 %v874, 16
        %v917 = vrot.slane %v915, 1
        %v918 = vor.u32 %v913, %v917
        %v920 = vshrl.u32 %v875, 16
        %v922 = vshll.u32 %v875, 16
        %v924 = vrot.slane %v922, 1
        %v925 = vor.u32 %v920, %v924
        %v927 = vshrl.u32 %v876, 16
        %v929 = vshll.u32 %v876, 16
        %v931 = vrot.slane %v929, 1
        %v932 = vor.u32 %v927, %v931
        %933 = vrot.lane.b32.xlu0 %v883, 8
        %v934 = vpop.permute.xlu0 %933
        %935 = vrot.lane.b32.xlu0 %v890, 8
        %v936 = vpop.permute.xlu0 %935
        %937 = vrot.lane.b32.xlu0 %v897, 8
        %v938 = vpop.permute.xlu0 %937
        %939 = vrot.lane.b32.xlu0 %v904, 8
        %v940 = vpop.permute.xlu0 %939
        %941 = vrot.lane.b32.xlu0 %v911, 8
        %v942 = vpop.permute.xlu0 %941
        %943 = vrot.lane.b32.xlu0 %v918, 8
        %v944 = vpop.permute.xlu0 %943
        %945 = vrot.lane.b32.xlu0 %v925, 8
        %v946 = vpop.permute.xlu0 %945
        %947 = vrot.lane.b32.xlu0 %v932, 8
        %v948 = vpop.permute.xlu0 %947
        %vm949 = vcmask 31744
        %v952 = vsel %vm949, %v737, %v822
        %v955 = vsel %vm949, %v739, %v824
        %v958 = vsel %vm949, %v741, %v826
        %v961 = vsel %vm949, %v743, %v828
        %v964 = vsel %vm949, %v745, %v830
        %v967 = vsel %vm949, %v747, %v832
        %v970 = vsel %vm949, %v749, %v834
        %v973 = vsel %vm949, %v751, %v836
        %vm974 = vcmask 64512
        %v976 = vsel %vm974, %v952, %v934
        %v978 = vsel %vm974, %v955, %v936
        %v980 = vsel %vm974, %v958, %v938
        %v982 = vsel %vm974, %v961, %v940
        %v984 = vsel %vm974, %v964, %v942
        %v986 = vsel %vm974, %v967, %v944
        %v988 = vsel %vm974, %v970, %v946
        %v990 = vsel %vm974, %v973, %v948
        %v992 = vlaneseq
        %v993 = vshrl.u32 %v992, 7
        %v994 = vsub.s32 0, %v993
        %v995 = vrot.slane %v796, %v994
        %v1005 = vunpack.c.l.b16 %v976
        %v1006 = vunpack.c.l.b16 %v978
        %v1007 = vunpack.c.l.b16 %v980
        %v1008 = vunpack.c.l.b16 %v982
        %v1009 = vunpack.c.l.b16 %v984
        %v1010 = vunpack.c.l.b16 %v986
        %v1011 = vunpack.c.l.b16 %v988
        %v1012 = vunpack.c.l.b16 %v990
        %v1013 = vpack.c.b16 %v1006, %v1005
        %v1014 = vpack.c.b16 %v1008, %v1007
        %v1015 = vpack.c.b16 %v1010, %v1009
        %v1016 = vpack.c.b16 %v1012, %v1011
        %v1019 = vunpack.c.l.b16 %v788
        %v1020 = vunpack.c.l.b16 %v789
        %v1021 = vpack.c.b16 %v1020, %v1019
        %vm1022 = vcmask 97280
        %v1024 = vsel %vm1022, %v1013, 0
        %v1027 = vsel %vm1022, %v1014, 0
        %v1030 = vsel %vm1022, %v1015, 0
        %v1033 = vsel %vm1022, %v1016, 0
        %vm1035 = vcmask 1045504
        %v1037 = vsel %vm1035, %v1021, 0
        %1039 = vmatprep.subr.bf16.mxu0 0
        %1040 = vmatpush1.bf16.msra.mxu0 0
        %1041 = vmatprep.subr.bf16.mxu0 0
        %1042 = vmatpush1.bf16.msra.mxu0 0
        %1043 = vmatprep.subr.bf16.mxu0 0
        %1044 = vmatpush1.bf16.msra.mxu0 0
        %1045 = vmatprep.subr.bf16.mxu0 0
        %1046 = vmatpush1.bf16.msra.mxu0 0
        %1047 = vmatprep.subr.bf16.mxu0 0
        %1048 = vmatpush1.bf16.msra.mxu0 0
        %1049 = vmatprep.subr.bf16.mxu0 0
        %1050 = vmatpush1.bf16.msra.mxu0 0
        %1051 = vmatprep.subr.bf16.mxu0 0
        %1052 = vmatpush1.bf16.msra.mxu0 0
        %1053 = vmatprep.subr.bf16.mxu0 0
        %1054 = vmatpush1.bf16.msra.mxu0 %v1037
        %1055 = vmatprep.subr.bf16.mxu0 0
        %1056 = vmatpush2.bf16.msra.mxu0 0
        %1057 = vmatprep.subr.bf16.mxu0 0
        %1058 = vmatpush2.bf16.msra.mxu0 0
        %1059 = vmatprep.subr.bf16.mxu0 0
        %1060 = vmatpush2.bf16.msra.mxu0 0
        %1061 = vmatprep.subr.bf16.mxu0 0
        %1062 = vmatpush2.bf16.msra.mxu0 0
        %1063 = vmatprep.subr.bf16.mxu0 0
        %1064 = vmatpush2.bf16.msra.mxu0 0
        %1065 = vmatprep.subr.bf16.mxu0 0
        %1066 = vmatpush2.bf16.msra.mxu0 0
        %1067 = vmatprep.subr.bf16.mxu0 0
        %1068 = vmatpush2.bf16.msra.mxu0 0
        %1069 = vmatprep.subr.bf16.mxu0 0
        %1070 = vmatpush2.bf16.msra.mxu0 0
        %1071 = vmatprep.mubr.bf16.mxu0 0
        %1072 = vmatmul.mubr.bf16.gmra.mxu0 %v1024
        %v1073 = vpop.f32.mrf.mxu0
        %v1074 = vadd.f32 %v995, %v1073
        %v1075 = vpop.f32.mrf.mxu0
        %v1076 = vpop.f32.mrf.mxu0
        %v1077 = vadd.f32 %v995, %v1076
        %v1078 = vpop.f32.mrf.mxu0
        %1079 = vmatprep.mubr.bf16.mxu0 0
        %1080 = vmatmul.mubr.bf16.gmra.mxu0 %v1027
        %v1081 = vpop.f32.mrf.mxu0
        %v1082 = vadd.f32 %v995, %v1081
        %v1083 = vpop.f32.mrf.mxu0
        %v1084 = vpop.f32.mrf.mxu0
        %v1085 = vadd.f32 %v995, %v1084
        %v1086 = vpop.f32.mrf.mxu0
        %1087 = vmatprep.mubr.bf16.mxu0 0
        %1088 = vmatmul.mubr.bf16.gmra.mxu0 %v1030
        %v1089 = vpop.f32.mrf.mxu0
        %v1090 = vadd.f32 %v995, %v1089
        %v1091 = vpop.f32.mrf.mxu0
        %v1092 = vpop.f32.mrf.mxu0
        %v1093 = vadd.f32 %v995, %v1092
        %v1094 = vpop.f32.mrf.mxu0
        %1095 = vmatprep.mubr.bf16.mxu0 0
        %1096 = vmatmul.mubr.bf16.gmra.mxu0 %v1033
        %v1097 = vpop.f32.mrf.mxu0
        %v1098 = vadd.f32 %v995, %v1097
        %v1099 = vpop.f32.mrf.mxu0
        %v1100 = vpop.f32.mrf.mxu0
        %v1101 = vadd.f32 %v995, %v1100
        %v1102 = vpop.f32.mrf.mxu0
        %1103 = vdwg.mxu0
        %v1112 = vunpack.c.l.b16 %v780
        %v1113 = vunpack.c.l.b16 %v781
        %v1114 = vunpack.c.l.b16 %v782
        %v1115 = vunpack.c.l.b16 %v783
        %v1116 = vunpack.c.l.b16 %v784
        %v1117 = vunpack.c.l.b16 %v785
        %v1118 = vunpack.c.l.b16 %v786
        %v1119 = vunpack.c.l.b16 %v787
        %v1120 = vpack.c.b16 %v1112, %v1112
        %v1121 = vpack.c.b16 %v1113, %v1113
        %v1122 = vpack.c.b16 %v1114, %v1114
        %v1123 = vpack.c.b16 %v1115, %v1115
        %v1124 = vpack.c.b16 %v1116, %v1116
        %v1125 = vpack.c.b16 %v1117, %v1117
        %v1126 = vpack.c.b16 %v1118, %v1118
        %v1127 = vpack.c.b16 %v1119, %v1119
        %1128 = vrot.lane.b32.xlu0 %v1120, 4
        %v1129 = vpop.permute.xlu0 %1128
        %1130 = vrot.lane.b32.xlu0 %v1121, 4
        %v1131 = vpop.permute.xlu0 %1130
        %1132 = vrot.lane.b32.xlu0 %v1122, 4
        %v1133 = vpop.permute.xlu0 %1132
        %1134 = vrot.lane.b32.xlu0 %v1123, 4
        %v1135 = vpop.permute.xlu0 %1134
        %1136 = vrot.lane.b32.xlu0 %v1124, 4
        %v1137 = vpop.permute.xlu0 %1136
        %1138 = vrot.lane.b32.xlu0 %v1125, 4
        %v1139 = vpop.permute.xlu0 %1138
        %1140 = vrot.lane.b32.xlu0 %v1126, 4
        %v1141 = vpop.permute.xlu0 %1140
        %1142 = vrot.lane.b32.xlu0 %v1127, 4
        %v1143 = vpop.permute.xlu0 %1142
        %v1160 = vunpack.c.l.b16 %v763
        %v1161 = vunpack.c.l.b16 %v764
        %v1162 = vunpack.c.l.b16 %v765
        %v1163 = vunpack.c.l.b16 %v766
        %v1164 = vunpack.c.l.b16 %v767
        %v1165 = vunpack.c.l.b16 %v768
        %v1166 = vunpack.c.l.b16 %v769
        %v1167 = vunpack.c.l.b16 %v770
        %v1168 = vunpack.c.l.b16 %v771
        %v1169 = vunpack.c.l.b16 %v772
        %v1170 = vunpack.c.l.b16 %v773
        %v1171 = vunpack.c.l.b16 %v774
        %v1172 = vunpack.c.l.b16 %v775
        %v1173 = vunpack.c.l.b16 %v776
        %v1174 = vunpack.c.l.b16 %v777
        %v1175 = vunpack.c.l.b16 %v778
        %v1176 = vpack.c.b16 %v1161, %v1160
        %v1177 = vpack.c.b16 %v1163, %v1162
        %v1178 = vpack.c.b16 %v1165, %v1164
        %v1179 = vpack.c.b16 %v1167, %v1166
        %v1180 = vpack.c.b16 %v1169, %v1168
        %v1181 = vpack.c.b16 %v1171, %v1170
        %v1182 = vpack.c.b16 %v1173, %v1172
        %v1183 = vpack.c.b16 %v1175, %v1174
        %v1185 = vshrl.u32 %v1176, 16
        %v1187 = vshll.u32 %v1176, 16
        %v1189 = vrot.slane %v1187, 1
        %v1190 = vor.u32 %v1185, %v1189
        %v1192 = vshrl.u32 %v1177, 16
        %v1194 = vshll.u32 %v1177, 16
        %v1196 = vrot.slane %v1194, 1
        %v1197 = vor.u32 %v1192, %v1196
        %v1199 = vshrl.u32 %v1178, 16
        %v1201 = vshll.u32 %v1178, 16
        %v1203 = vrot.slane %v1201, 1
        %v1204 = vor.u32 %v1199, %v1203
        %v1206 = vshrl.u32 %v1179, 16
        %v1208 = vshll.u32 %v1179, 16
        %v1210 = vrot.slane %v1208, 1
        %v1211 = vor.u32 %v1206, %v1210
        %v1213 = vshrl.u32 %v1180, 16
        %v1215 = vshll.u32 %v1180, 16
        %v1217 = vrot.slane %v1215, 1
        %v1218 = vor.u32 %v1213, %v1217
        %v1220 = vshrl.u32 %v1181, 16
        %v1222 = vshll.u32 %v1181, 16
        %v1224 = vrot.slane %v1222, 1
        %v1225 = vor.u32 %v1220, %v1224
        %v1227 = vshrl.u32 %v1182, 16
        %v1229 = vshll.u32 %v1182, 16
        %v1231 = vrot.slane %v1229, 1
        %v1232 = vor.u32 %v1227, %v1231
        %v1234 = vshrl.u32 %v1183, 16
        %v1236 = vshll.u32 %v1183, 16
        %v1238 = vrot.slane %v1236, 1
        %v1239 = vor.u32 %v1234, %v1238
        %1240 = vrot.lane.b32.xlu0 %v1190, 8
        %v1241 = vpop.permute.xlu0 %1240
        %1242 = vrot.lane.b32.xlu0 %v1197, 8
        %v1243 = vpop.permute.xlu0 %1242
        %1244 = vrot.lane.b32.xlu0 %v1204, 8
        %v1245 = vpop.permute.xlu0 %1244
        %1246 = vrot.lane.b32.xlu0 %v1211, 8
        %v1247 = vpop.permute.xlu0 %1246
        %1248 = vrot.lane.b32.xlu0 %v1218, 8
        %v1249 = vpop.permute.xlu0 %1248
        %1250 = vrot.lane.b32.xlu0 %v1225, 8
        %v1251 = vpop.permute.xlu0 %1250
        %1252 = vrot.lane.b32.xlu0 %v1232, 8
        %v1253 = vpop.permute.xlu0 %1252
        %1254 = vrot.lane.b32.xlu0 %v1239, 8
        %v1255 = vpop.permute.xlu0 %1254
        %v1258 = vsel %vm949, %v763, %v1129
        %v1261 = vsel %vm949, %v765, %v1131
        %v1264 = vsel %vm949, %v767, %v1133
        %v1267 = vsel %vm949, %v769, %v1135
        %v1270 = vsel %vm949, %v771, %v1137
        %v1273 = vsel %vm949, %v773, %v1139
        %v1276 = vsel %vm949, %v775, %v1141
        %v1279 = vsel %vm949, %v777, %v1143
        %v1281 = vsel %vm974, %v1258, %v1241
        %v1283 = vsel %vm974, %v1261, %v1243
        %v1285 = vsel %vm974, %v1264, %v1245
        %v1287 = vsel %vm974, %v1267, %v1247
        %v1289 = vsel %vm974, %v1270, %v1249
        %v1291 = vsel %vm974, %v1273, %v1251
        %v1293 = vsel %vm974, %v1276, %v1253
        %v1295 = vsel %vm974, %v1279, %v1255
        %v1304 = vunpack.c.l.b16 %v1281
        %v1305 = vunpack.c.l.b16 %v1283
        %v1306 = vunpack.c.l.b16 %v1285
        %v1307 = vunpack.c.l.b16 %v1287
        %v1308 = vunpack.c.l.b16 %v1289
        %v1309 = vunpack.c.l.b16 %v1291
        %v1310 = vunpack.c.l.b16 %v1293
        %v1311 = vunpack.c.l.b16 %v1295
        %v1312 = vpack.c.b16 %v1305, %v1304
        %v1313 = vpack.c.b16 %v1307, %v1306
        %v1314 = vpack.c.b16 %v1309, %v1308
        %v1315 = vpack.c.b16 %v1311, %v1310
        %v1318 = vunpack.c.l.b16 %v791
        %v1319 = vunpack.c.l.b16 %v792
        %v1320 = vpack.c.b16 %v1319, %v1318
        %v1322 = vsel %vm1022, %v1312, 0
        %v1325 = vsel %vm1022, %v1313, 0
        %v1328 = vsel %vm1022, %v1314, 0
        %v1331 = vsel %vm1022, %v1315, 0
        %v1334 = vsel %vm1035, %v1320, 0
        %1336 = vmatprep.subr.bf16.mxu0 0
        %1337 = vmatpush1.bf16.msra.mxu0 0
        %1338 = vmatprep.subr.bf16.mxu0 0
        %1339 = vmatpush1.bf16.msra.mxu0 0
        %1340 = vmatprep.subr.bf16.mxu0 0
        %1341 = vmatpush1.bf16.msra.mxu0 0
        %1342 = vmatprep.subr.bf16.mxu0 0
        %1343 = vmatpush1.bf16.msra.mxu0 0
        %1344 = vmatprep.subr.bf16.mxu0 0
        %1345 = vmatpush1.bf16.msra.mxu0 0
        %1346 = vmatprep.subr.bf16.mxu0 0
        %1347 = vmatpush1.bf16.msra.mxu0 0
        %1348 = vmatprep.subr.bf16.mxu0 0
        %1349 = vmatpush1.bf16.msra.mxu0 0
        %1350 = vmatprep.subr.bf16.mxu0 0
        %1351 = vmatpush1.bf16.msra.mxu0 %v1334
        %1352 = vmatprep.subr.bf16.mxu0 0
        %1353 = vmatpush2.bf16.msra.mxu0 0
        %1354 = vmatprep.subr.bf16.mxu0 0
        %1355 = vmatpush2.bf16.msra.mxu0 0
        %1356 = vmatprep.subr.bf16.mxu0 0
        %1357 = vmatpush2.bf16.msra.mxu0 0
        %1358 = vmatprep.subr.bf16.mxu0 0
        %1359 = vmatpush2.bf16.msra.mxu0 0
        %1360 = vmatprep.subr.bf16.mxu0 0
        %1361 = vmatpush2.bf16.msra.mxu0 0
        %1362 = vmatprep.subr.bf16.mxu0 0
        %1363 = vmatpush2.bf16.msra.mxu0 0
        %1364 = vmatprep.subr.bf16.mxu0 0
        %1365 = vmatpush2.bf16.msra.mxu0 0
        %1366 = vmatprep.subr.bf16.mxu0 0
        %1367 = vmatpush2.bf16.msra.mxu0 0
        %1368 = vmatprep.mubr.bf16.mxu0 0
        %1369 = vmatmul.mubr.bf16.gmra.mxu0 %v1322
        %v1370 = vpop.f32.mrf.mxu0
        %v1371 = vadd.f32 0.0, %v1370
        %v1372 = vpop.f32.mrf.mxu0
        %v1373 = vpop.f32.mrf.mxu0
        %v1374 = vadd.f32 0.0, %v1373
        %v1375 = vpop.f32.mrf.mxu0
        %1376 = vmatprep.mubr.bf16.mxu0 0
        %1377 = vmatmul.mubr.bf16.gmra.mxu0 %v1325
        %v1378 = vpop.f32.mrf.mxu0
        %v1379 = vadd.f32 0.0, %v1378
        %v1380 = vpop.f32.mrf.mxu0
        %v1381 = vpop.f32.mrf.mxu0
        %v1382 = vadd.f32 0.0, %v1381
        %v1383 = vpop.f32.mrf.mxu0
        %1384 = vmatprep.mubr.bf16.mxu0 0
        %1385 = vmatmul.mubr.bf16.gmra.mxu0 %v1328
        %v1386 = vpop.f32.mrf.mxu0
        %v1387 = vadd.f32 0.0, %v1386
        %v1388 = vpop.f32.mrf.mxu0
        %v1389 = vpop.f32.mrf.mxu0
        %v1390 = vadd.f32 0.0, %v1389
        %v1391 = vpop.f32.mrf.mxu0
        %1392 = vmatprep.mubr.bf16.mxu0 0
        %1393 = vmatmul.mubr.bf16.gmra.mxu0 %v1331
        %v1394 = vpop.f32.mrf.mxu0
        %v1395 = vadd.f32 0.0, %v1394
        %v1396 = vpop.f32.mrf.mxu0
        %v1397 = vpop.f32.mrf.mxu0
        %v1398 = vadd.f32 0.0, %v1397
        %v1399 = vpop.f32.mrf.mxu0
        %1400 = vdwg.mxu0
        %v1401 = vadd.f32 %v1074, %v1371
        %v1402 = vadd.f32 %v1077, %v1374
        %v1403 = vadd.f32 %v1082, %v1379
        %v1404 = vadd.f32 %v1085, %v1382
        %v1405 = vadd.f32 %v1090, %v1387
        %v1406 = vadd.f32 %v1093, %v1390
        %v1407 = vadd.f32 %v1098, %v1395
        %v1408 = vadd.f32 %v1101, %v1398
        %v1409 = vld [vmem:[%s687] sm:$0xf]
        %v1410 = vld [vmem:[%s687 + $0x4] sm:$0x1]
        %s1411 = scalar_lea.vmem %s687, 8 [#allocation3]
        %v1412 = vld [vmem:[%s1411] sm:$0xf]
        %v1414 = vunpack.c.l.b16 %v1412
        %v1415 = vpack.c.b16 %v1414, %v1414
        %1416 = vrot.lane.b32.xlu0 %v1415, 4
        %v1417 = vpop.permute.xlu0 %1416
        %v1420 = vunpack.c.l.b16 %v1409
        %v1421 = vunpack.c.l.b16 %v1410
        %v1422 = vpack.c.b16 %v1421, %v1420
        %v1424 = vshrl.u32 %v1422, 16
        %v1426 = vshll.u32 %v1422, 16
        %v1428 = vrot.slane %v1426, 1
        %v1429 = vor.u32 %v1424, %v1428
        %1430 = vrot.lane.b32.xlu0 %v1429, 8
        %v1431 = vpop.permute.xlu0 %1430
        %v1434 = vsel %vm949, %v1409, %v1417
        %v1436 = vsel %vm974, %v1434, %v1431
        %v1439 = vunpack.c.l.b16 %v794
        %v1440 = vunpack.c.l.b16 %v795
        %v1441 = vpack.c.b16 %v1440, %v1439
        %v1442 = vsel %vm1022, %v1436, 0
        %v1445 = vsel %vm1035, %v1441, 0
        %1447 = vmatprep.subr.bf16.mxu0 0
        %1448 = vmatpush1.bf16.msra.mxu0 0
        %1449 = vmatprep.subr.bf16.mxu0 0
        %1450 = vmatpush1.bf16.msra.mxu0 0
        %1451 = vmatprep.subr.bf16.mxu0 0
        %1452 = vmatpush1.bf16.msra.mxu0 0
        %1453 = vmatprep.subr.bf16.mxu0 0
        %1454 = vmatpush1.bf16.msra.mxu0 0
        %1455 = vmatprep.subr.bf16.mxu0 0
        %1456 = vmatpush1.bf16.msra.mxu0 0
        %1457 = vmatprep.subr.bf16.mxu0 0
        %1458 = vmatpush1.bf16.msra.mxu0 0
        %1459 = vmatprep.subr.bf16.mxu0 0
        %1460 = vmatpush1.bf16.msra.mxu0 0
        %1461 = vmatprep.subr.bf16.mxu0 0
        %1462 = vmatpush1.bf16.msra.mxu0 %v1445
        %1463 = vmatprep.subr.bf16.mxu0 0
        %1464 = vmatpush2.bf16.msra.mxu0 0
        %1465 = vmatprep.subr.bf16.mxu0 0
        %1466 = vmatpush2.bf16.msra.mxu0 0
        %1467 = vmatprep.subr.bf16.mxu0 0
        %1468 = vmatpush2.bf16.msra.mxu0 0
        %1469 = vmatprep.subr.bf16.mxu0 0
        %1470 = vmatpush2.bf16.msra.mxu0 0
        %1471 = vmatprep.subr.bf16.mxu0 0
        %1472 = vmatpush2.bf16.msra.mxu0 0
        %1473 = vmatprep.subr.bf16.mxu0 0
        %1474 = vmatpush2.bf16.msra.mxu0 0
        %1475 = vmatprep.subr.bf16.mxu0 0
        %1476 = vmatpush2.bf16.msra.mxu0 0
        %1477 = vmatprep.subr.bf16.mxu0 0
        %1478 = vmatpush2.bf16.msra.mxu0 0
        %1479 = vmatprep.mubr.bf16.mxu0 0
        %1480 = vmatmul.mubr.bf16.gmra.mxu0 %v1442
        %v1481 = vpop.f32.mrf.mxu0
        %v1482 = vadd.f32 0.0, %v1481
        %v1483 = vpop.f32.mrf.mxu0
        %v1484 = vpop.f32.mrf.mxu0
        %v1485 = vpop.f32.mrf.mxu0
        %1486 = vdwg.mxu0
        %v1487 = vpack.c.b16 %v1007, %v1006
        %v1488 = vpack.c.b16 %v1009, %v1008
        %v1489 = vpack.c.b16 %v1011, %v1010
        %v1490 = vpack.c.b16 %v1012, %v1012
        %v1492 = vsel %vm1022, %v1487, 0
        %v1495 = vsel %vm1022, %v1488, 0
        %v1498 = vsel %vm1022, %v1489, 0
        %v1501 = vsel %vm1022, %v1490, 0
        %1503 = vmatprep.subr.bf16.mxu0 0
        %1504 = vmatpush1.bf16.msra.mxu0 0
        %1505 = vmatprep.subr.bf16.mxu0 0
        %1506 = vmatpush1.bf16.msra.mxu0 0
        %1507 = vmatprep.subr.bf16.mxu0 0
        %1508 = vmatpush1.bf16.msra.mxu0 0
        %1509 = vmatprep.subr.bf16.mxu0 0
        %1510 = vmatpush1.bf16.msra.mxu0 0
        %1511 = vmatprep.subr.bf16.mxu0 0
        %1512 = vmatpush1.bf16.msra.mxu0 0
        %1513 = vmatprep.subr.bf16.mxu0 0
        %1514 = vmatpush1.bf16.msra.mxu0 0
        %1515 = vmatprep.subr.bf16.mxu0 0
        %1516 = vmatpush1.bf16.msra.mxu0 0
        %1517 = vmatprep.subr.bf16.mxu0 0
        %1518 = vmatpush1.bf16.msra.mxu0 %v1445
        %1519 = vmatprep.subr.bf16.mxu0 0
        %1520 = vmatpush2.bf16.msra.mxu0 0
        %1521 = vmatprep.subr.bf16.mxu0 0
        %1522 = vmatpush2.bf16.msra.mxu0 0
        %1523 = vmatprep.subr.bf16.mxu0 0
        %1524 = vmatpush2.bf16.msra.mxu0 0
        %1525 = vmatprep.subr.bf16.mxu0 0
        %1526 = vmatpush2.bf16.msra.mxu0 0
        %1527 = vmatprep.subr.bf16.mxu0 0
        %1528 = vmatpush2.bf16.msra.mxu0 0
        %1529 = vmatprep.subr.bf16.mxu0 0
        %1530 = vmatpush2.bf16.msra.mxu0 0
        %1531 = vmatprep.subr.bf16.mxu0 0
        %1532 = vmatpush2.bf16.msra.mxu0 0
        %1533 = vmatprep.subr.bf16.mxu0 0
        %1534 = vmatpush2.bf16.msra.mxu0 0
        %1535 = vmatprep.mubr.bf16.mxu0 0
        %1536 = vmatmul.mubr.bf16.gmra.mxu0 %v1492
        %v1537 = vpop.f32.mrf.mxu0
        %v1538 = vadd.f32 0.0, %v1537
        %v1539 = vpop.f32.mrf.mxu0
        %v1540 = vpop.f32.mrf.mxu0
        %v1541 = vadd.f32 0.0, %v1540
        %v1542 = vpop.f32.mrf.mxu0
        %1543 = vmatprep.mubr.bf16.mxu0 0
        %1544 = vmatmul.mubr.bf16.gmra.mxu0 %v1495
        %v1545 = vpop.f32.mrf.mxu0
        %v1546 = vadd.f32 0.0, %v1545
        %v1547 = vpop.f32.mrf.mxu0
        %v1548 = vpop.f32.mrf.mxu0
        %v1549 = vadd.f32 0.0, %v1548
        %v1550 = vpop.f32.mrf.mxu0
        %1551 = vmatprep.mubr.bf16.mxu0 0
        %1552 = vmatmul.mubr.bf16.gmra.mxu0 %v1498
        %v1553 = vpop.f32.mrf.mxu0
        %v1554 = vadd.f32 0.0, %v1553
        %v1555 = vpop.f32.mrf.mxu0
        %v1556 = vpop.f32.mrf.mxu0
        %v1557 = vadd.f32 0.0, %v1556
        %v1558 = vpop.f32.mrf.mxu0
        %1559 = vmatprep.mubr.bf16.mxu0 0
        %1560 = vmatmul.mubr.bf16.gmra.mxu0 %v1501
        %v1561 = vpop.f32.mrf.mxu0
        %v1562 = vadd.f32 0.0, %v1561
        %v1563 = vpop.f32.mrf.mxu0
        %v1564 = vpop.f32.mrf.mxu0
        %v1565 = vpop.f32.mrf.mxu0
        %1566 = vdwg.mxu0
        %v1567 = vadd.f32 %v1401, %v1538
        %v1568 = vadd.f32 %v1402, %v1541
        %v1569 = vadd.f32 %v1403, %v1546
        %v1570 = vadd.f32 %v1404, %v1549
        %v1571 = vadd.f32 %v1405, %v1554
        %v1572 = vadd.f32 %v1406, %v1557
        %v1573 = vadd.f32 %v1407, %v1562
        %1574 = vst.msk [vmem:[%s734] sm:$0xff] %vm949, %v1567
        %1575 = vst.msk [vmem:[%s734 + $0x8] sm:$0xff] %vm949, %v1568
        %1576 = vst.msk [vmem:[%s734 + $0x10] sm:$0xff] %vm949, %v1569
        %1577 = vst.msk [vmem:[%s734 + $0x18] sm:$0xff] %vm949, %v1570
        %1578 = vst.msk [vmem:[%s734 + $0x20] sm:$0xff] %vm949, %v1571
        %1579 = vst.msk [vmem:[%s734 + $0x28] sm:$0xff] %vm949, %v1572
        %1580 = vst.msk [vmem:[%s734 + $0x30] sm:$0xff] %vm949, %v1573
        %v1581 = vadd.f32 %v1408, %v1482
        %s1582 = scalar_lea.vmem %s734, 56
        %1583 = vst.msk [vmem:[%s1582] sm:$0xff] %vm949, %v1581
        %s1584 = smul.u32 8, %s20
        %p1585 = scmp.lt.s32.totalorder %s19, 1
        %s1586 = scalar_select %p1585, %s19, 1
        %p1587 = scmp.lt.s32.totalorder %s1584, 7
        %s1588 = scalar_select %p1587, %s1584, 7
        %s1589 = smul.addr %s1586, 8
        %s1590 = sadd.s32 %s1588, %s1589
        %s1591 = smul.addr %s1590, 8
        %s1592 = scalar_lea.vmem %s4, %s1591
        // Predicated region
        $region140: #{_lambda_.1} parent=130 // pred_check
          %p1593 = pneg %p149
        $region141: #{_lambda_.1} parent=130 // pred_check_branch
          %1595 = sbr.rel (%p1593) target = $region143
        $region142: #{_lambda_.1} parent=130 // pred_region
          %s1596 = smul.u32 8, %s20
        $region143: #{_lambda_.1} parent=130 // pred_fallthru
          _
      $region131: #{_lambda_.1} parent=5 // pred_fallthru
        _
      %p1597 = scmp.le.s32.totalorder 2, %s10
      // Predicated region
      $region144: #{_lambda_.1} parent=5 // pred_check
        %p1598 = pneg %p1597
      $region145: #{_lambda_.1} parent=5 // pred_check_branch
        %1600 = sbr.rel (%p1598) target = $region147
      $region146: #{_lambda_.1} parent=5 // pred_region
        %s1601 = ssub.s32 %s10, 2
        // Predicated region
        $region148: #{_lambda_.1} parent=146 // pred_check
          %p1602 = pneg %p155
        $region149: #{_lambda_.1} parent=146 // pred_check_branch
          %1604 = sbr.rel (%p1602) target = $region151
        $region150: #{_lambda_.1} parent=146 // pred_region
          %s1605 = smul.u32 8, %s22
          %p1606 = scmp.lt.s32.totalorder %s21, 1
          %s1607 = scalar_select %p1606, %s21, 1
          %p1608 = scmp.lt.s32.totalorder %s1605, 7
          %s1609 = scalar_select %p1608, %s1605, 7
          %s1610 = smul.addr %s1607, 8
          %s1611 = sadd.s32 %s1609, %s1610
          %s1612 = smul.addr %s1611, 8
          %s1613 = scalar_lea.vmem %s4, %s1612
        $region151: #{_lambda_.1} parent=146 // pred_fallthru
          _
      $region147: #{_lambda_.1} parent=5 // pred_fallthru
        _
    $region6: #{_lambda_.1} parent=1 // loop_footer
      %s14 = sadd.s32 1, %s10
    $region7: #{_lambda_.1} parent=1 // loop_footer_branch
      %9 = sbr.rel target = $region3
    $region8: #{_lambda_.1} parent=1 // loop_exit
      _

</llo_original>
